<compile_context>
chip_gen: v5e
topology: v5e:2x2
jax: 0.10.0
libtpu: 0.0.40
codegen_flags: <defaults>
</compile_context>

<pallas_src>
import jax
import jax.numpy as jnp
from jax.experimental import pallas as pl
from jax.experimental.pallas import tpu as pltpu

# Vocab sizes from the module (kept exact); small batch / embedding for the demo.
VOCAB_ICD = 942
VOCAB_MED = 3202
VOCAB_LAB = 284
VOCAB_ALL = VOCAB_ICD + VOCAB_MED + VOCAB_LAB   # 4428
EMB = 32
BATCH = 8


def _round_up(n, m):
    return ((n + m - 1) // m) * m


def _cae_kernel(xi_ref, xm_ref, xl_ref,
                wi_ref, wm_ref, wl_ref, b1_ref,
                w2_ref, b2_ref,
                h_ref, o_ref):
    # Inputs stream as bf16 (exact for multi-hot 0/1 codes); cast back on the VPU.
    xi = xi_ref[...].astype(jnp.float32)
    xm = xm_ref[...].astype(jnp.float32)
    xl = xl_ref[...].astype(jnp.float32)

    # ---- layer 1: each modality contracted exactly once on the MXU.
    # Weights are stored (E, V_i_pad) with the vocab axis lane-dense, so the DMA carries
    # no E-padding; the NT contraction's RHS transpose runs on the XLU (hidden under DMA).
    dn = (((1,), (1,)), ((), ()))
    p_icd = jax.lax.dot_general(xi, wi_ref[...], dimension_numbers=dn,
                                preferred_element_type=jnp.float32)
    p_med = jax.lax.dot_general(xm, wm_ref[...], dimension_numbers=dn,
                                preferred_element_type=jnp.float32)
    p_lab = jax.lax.dot_general(xl, wl_ref[...], dimension_numbers=dn,
                                preferred_element_type=jnp.float32)
    b1 = b1_ref[...]                                          # (1, E)

    # ---- form the 4 variants with VPU adds + ReLU (no masked matmuls) ----
    h_full = jnp.maximum(p_icd + p_med + p_lab + b1, 0.0)
    h_icd = jnp.maximum(p_icd + b1, 0.0)
    h_med = jnp.maximum(p_med + b1, 0.0)
    h_lab = jnp.maximum(p_lab + b1, 0.0)

    # variant order along rows: 0=full, 1=only-icd, 2=only-med, 3=only-lab
    h = jnp.concatenate((h_full, h_icd, h_med, h_lab), axis=0)   # (4B, E)
    h_ref[...] = h.astype(h_ref.dtype)

    # ---- layer 2: single stacked (4B, E) @ (E, V_pad) matmul for all 4 variants ----
    o = jnp.dot(h, w2_ref[...], preferred_element_type=jnp.float32) + b2_ref[...]
    o_ref[...] = jnp.maximum(o, 0.0).astype(o_ref.dtype)


def cae_forward_pallas(input_icd, input_med, input_lab, w_emb, b_emb, w_out, b_out):
    """Exact semantics of CAE.forward.

    input_icd: (B, V_icd), input_med: (B, V_med), input_lab: (B, V_lab), float32
    multi-hot code vectors.
    w_emb: (V, E), b_emb: (E,), w_out: (E, V), b_out: (V,)   (weights stored transposed
    vs. torch nn.Linear so the math is x @ W).
    Returns the same 8-tensor list as the PyTorch module.
    """
    B = input_icd.shape[0]
    V = VOCAB_ALL
    E = w_emb.shape[1]
    Vi_pad = _round_up(VOCAB_ICD, 128)    # 1024
    Vm_pad = _round_up(VOCAB_MED, 128)    # 3328
    Vl_pad = _round_up(VOCAB_LAB, 128)    # 384
    V_pad = _round_up(V, 128)             # 4480 = 35*128, lane-dense output width

    # Layer-1 weights: split per modality, transpose so the vocab axis is the lane axis,
    # zero-pad only that lane axis (no E padding -> no wasted DMA bytes).
    w_icd_t = jnp.pad(w_emb[:VOCAB_ICD].T,
                      ((0, 0), (0, Vi_pad - VOCAB_ICD)))                 # (E, Vi_pad)
    w_med_t = jnp.pad(w_emb[VOCAB_ICD:VOCAB_ICD + VOCAB_MED].T,
                      ((0, 0), (0, Vm_pad - VOCAB_MED)))                 # (E, Vm_pad)
    w_lab_t = jnp.pad(w_emb[VOCAB_ICD + VOCAB_MED:].T,
                      ((0, 0), (0, Vl_pad - VOCAB_LAB)))                 # (E, Vl_pad)
    b1 = b_emb.reshape(1, E)

    # Layer-2 weight: pad only the output (V) axis; K stays at E (=32), which is legal
    # because the block's second-to-last dim equals the full array dim.
    w2 = jnp.pad(w_out, ((0, 0), (0, V_pad - V)))                        # (E, V_pad)
    b2 = jnp.pad(b_out, (0, V_pad - V)).reshape(1, V_pad)

    # Inputs: zero-pad the lane dim to match the weight padding and stream as bf16
    # (exact for 0/1 multi-hot values); cast back to f32 inside the kernel.
    xi = jnp.pad(input_icd, ((0, 0), (0, Vi_pad - VOCAB_ICD))).astype(jnp.bfloat16)
    xm = jnp.pad(input_med, ((0, 0), (0, Vm_pad - VOCAB_MED))).astype(jnp.bfloat16)
    xl = jnp.pad(input_lab, ((0, 0), (0, Vl_pad - VOCAB_LAB))).astype(jnp.bfloat16)

    def full(shape):
        return pl.BlockSpec(shape, lambda i, _s=shape: (0,) * len(_s))

    hidden, output = pl.pallas_call(
        _cae_kernel,
        out_shape=(
            jax.ShapeDtypeStruct((4 * B, E), jnp.float32),
            jax.ShapeDtypeStruct((4 * B, V_pad), jnp.float32),
        ),
        grid_spec=pltpu.PrefetchScalarGridSpec(
            num_scalar_prefetch=0,
            grid=(1,),                               # single step: whole problem is tiny
            in_specs=[
                full((B, Vi_pad)),                   # x_icd  (bf16)
                full((B, Vm_pad)),                   # x_med  (bf16)
                full((B, Vl_pad)),                   # x_lab  (bf16)
                full((E, Vi_pad)),                   # W_emb^T (icd cols, lane-dense)
                full((E, Vm_pad)),                   # W_emb^T (med cols, lane-dense)
                full((E, Vl_pad)),                   # W_emb^T (lab cols, lane-dense)
                full((1, E)),                        # b_emb
                full((E, V_pad)),                    # W_out (no K padding)
                full((1, V_pad)),                    # b_out
            ],
            out_specs=[
                full((4 * B, E)),                    # stacked hidden (tiny, unpadded)
                full((4 * B, V_pad)),                # stacked output (lane-dense)
            ],
        ),
        compiler_params=pltpu.CompilerParams(
            dimension_semantics=("arbitrary",),
        ),
    )(xi, xm, xl, w_icd_t, w_med_t, w_lab_t, b1, w2, b2)

    h = hidden.reshape(4, B, E)
    o = output.reshape(4, B, V_pad)[:, :, :V]
    # Same return order as the PyTorch module:
    # [out_full, out_icd, out_med, out_lab, h_icd, h_med, h_lab, h_full]
    return [o[0], o[1], o[2], o[3], h[1], h[2], h[3], h[0]]


def _reference_forward(input_icd, input_med, input_lab, w_emb, b_emb, w_out, b_out):
    zi, zm, zl = (jnp.zeros_like(input_icd), jnp.zeros_like(input_med),
                  jnp.zeros_like(input_lab))
    xs = [
        jnp.concatenate((input_icd, input_med, input_lab), 1),
        jnp.concatenate((input_icd, zm, zl), 1),
        jnp.concatenate((zi, input_med, zl), 1),
        jnp.concatenate((zi, zm, input_lab), 1),
    ]
    hs = [jnp.maximum(x @ w_emb + b_emb, 0.0) for x in xs]
    os = [jnp.maximum(h @ w_out + b_out, 0.0) for h in hs]
    return [os[0], os[1], os[2], os[3], hs[1], hs[2], hs[3], hs[0]]


if __name__ == "__main__":
    key = jax.random.PRNGKey(0)
    k_icd, k_med, k_lab, k_w1, k_b1, k_w2, k_b2 = jax.random.split(key, 7)

    # Binary multi-hot code inputs (like the ICD / med / lab code vectors), float32.
    input_icd = (jax.random.uniform(k_icd, (BATCH, VOCAB_ICD)) < 0.05).astype(jnp.float32)
    input_med = (jax.random.uniform(k_med, (BATCH, VOCAB_MED)) < 0.05).astype(jnp.float32)
    input_lab = (jax.random.uniform(k_lab, (BATCH, VOCAB_LAB)) < 0.05).astype(jnp.float32)

    # Deterministic nn.Linear-style init: U(-1/sqrt(fan_in), 1/sqrt(fan_in)).
    lim1 = 1.0 / jnp.sqrt(jnp.float32(VOCAB_ALL))
    lim2 = 1.0 / jnp.sqrt(jnp.float32(EMB))
    w_emb = jax.random.uniform(k_w1, (VOCAB_ALL, EMB), jnp.float32, -lim1, lim1)
    b_emb = jax.random.uniform(k_b1, (EMB,), jnp.float32, -lim1, lim1)
    w_out = jax.random.uniform(k_w2, (EMB, VOCAB_ALL), jnp.float32, -lim2, lim2)
    b_out = jax.random.uniform(k_b2, (VOCAB_ALL,), jnp.float32, -lim2, lim2)

    outs = cae_forward_pallas(input_icd, input_med, input_lab,
                              w_emb, b_emb, w_out, b_out)
    outs = jax.block_until_ready(outs)

    refs = _reference_forward(input_icd, input_med, input_lab,
                              w_emb, b_emb, w_out, b_out)
    for got, want in zip(outs, refs):
        assert got.shape == want.shape and got.dtype == want.dtype
        assert jnp.allclose(got, want, atol=1e-4, rtol=1e-4)

    print("KERNEL_OK")
</pallas_src>

<mosaic_0001>
module attributes {stable_mosaic.version = 11 : i64} {
  func.func @_cae_kernel(%arg0: i32, %arg1: memref<8x1024xbf16, #tpu.memory_space<vmem>>, %arg2: memref<8x3328xbf16, #tpu.memory_space<vmem>>, %arg3: memref<8x384xbf16, #tpu.memory_space<vmem>>, %arg4: memref<32x1024xf32, #tpu.memory_space<vmem>>, %arg5: memref<32x3328xf32, #tpu.memory_space<vmem>>, %arg6: memref<32x384xf32, #tpu.memory_space<vmem>>, %arg7: memref<1x32xf32, #tpu.memory_space<vmem>>, %arg8: memref<32x4480xf32, #tpu.memory_space<vmem>>, %arg9: memref<1x4480xf32, #tpu.memory_space<vmem>>, %arg10: memref<32x32xf32, #tpu.memory_space<vmem>>, %arg11: memref<32x4480xf32, #tpu.memory_space<vmem>>) attributes {dimension_semantics = [#tpu.dimension_semantics<arbitrary>], iteration_bounds = array<i64: 1>, scalar_prefetch = 0 : i64, scratch_operands = 0 : i64, tpu.core_type = #tpu.core_type<tc>, window_params = [{pipeline_mode = #tpu.pipeline_mode<synchronous>, transform_indices = @transform_0, window_bounds = array<i64: 8, 1024>}, {pipeline_mode = #tpu.pipeline_mode<synchronous>, transform_indices = @transform_1, window_bounds = array<i64: 8, 3328>}, {pipeline_mode = #tpu.pipeline_mode<synchronous>, transform_indices = @transform_2, window_bounds = array<i64: 8, 384>}, {pipeline_mode = #tpu.pipeline_mode<synchronous>, transform_indices = @transform_3, window_bounds = array<i64: 32, 1024>}, {pipeline_mode = #tpu.pipeline_mode<synchronous>, transform_indices = @transform_4, window_bounds = array<i64: 32, 3328>}, {pipeline_mode = #tpu.pipeline_mode<synchronous>, transform_indices = @transform_5, window_bounds = array<i64: 32, 384>}, {pipeline_mode = #tpu.pipeline_mode<synchronous>, transform_indices = @transform_6, window_bounds = array<i64: 1, 32>}, {pipeline_mode = #tpu.pipeline_mode<synchronous>, transform_indices = @transform_7, window_bounds = array<i64: 32, 4480>}, {pipeline_mode = #tpu.pipeline_mode<synchronous>, transform_indices = @transform_8, window_bounds = array<i64: 1, 4480>}, {pipeline_mode = #tpu.pipeline_mode<synchronous>, transform_indices = @transform_9, window_bounds = array<i64: 32, 32>}, {pipeline_mode = #tpu.pipeline_mode<synchronous>, transform_indices = @transform_10, window_bounds = array<i64: 32, 4480>}]} {
    %c0 = arith.constant 0 : index
    %c0_0 = arith.constant 0 : index
    %0 = vector.load %arg1[%c0, %c0_0] : memref<8x1024xbf16, #tpu.memory_space<vmem>>, vector<8x1024xbf16>
    %1 = arith.extf %0 : vector<8x1024xbf16> to vector<8x1024xf32>
    %c0_1 = arith.constant 0 : index
    %c0_2 = arith.constant 0 : index
    %2 = vector.load %arg2[%c0_1, %c0_2] : memref<8x3328xbf16, #tpu.memory_space<vmem>>, vector<8x3328xbf16>
    %3 = arith.extf %2 : vector<8x3328xbf16> to vector<8x3328xf32>
    %c0_3 = arith.constant 0 : index
    %c0_4 = arith.constant 0 : index
    %4 = vector.load %arg3[%c0_3, %c0_4] : memref<8x384xbf16, #tpu.memory_space<vmem>>, vector<8x384xbf16>
    %5 = arith.extf %4 : vector<8x384xbf16> to vector<8x384xf32>
    %c0_5 = arith.constant 0 : index
    %c0_6 = arith.constant 0 : index
    %6 = vector.load %arg4[%c0_5, %c0_6] : memref<32x1024xf32, #tpu.memory_space<vmem>>, vector<32x1024xf32>
    %cst = arith.constant dense<0.000000e+00> : vector<8x32xf32>
    %7 = tpu.matmul %1, %6, %cst {dimension_numbers = #tpu.dot_dimension_numbers<[1], [1], [0], [0], [0, 0, 1, 0], [], []>} : vector<8x1024xf32>, vector<32x1024xf32>, vector<8x32xf32> -> vector<8x32xf32>
    %c0_7 = arith.constant 0 : index
    %c0_8 = arith.constant 0 : index
    %8 = vector.load %arg5[%c0_7, %c0_8] : memref<32x3328xf32, #tpu.memory_space<vmem>>, vector<32x3328xf32>
    %cst_9 = arith.constant dense<0.000000e+00> : vector<8x32xf32>
    %9 = tpu.matmul %3, %8, %cst_9 {dimension_numbers = #tpu.dot_dimension_numbers<[1], [1], [0], [0], [0, 0, 1, 0], [], []>} : vector<8x3328xf32>, vector<32x3328xf32>, vector<8x32xf32> -> vector<8x32xf32>
    %c0_10 = arith.constant 0 : index
    %c0_11 = arith.constant 0 : index
    %10 = vector.load %arg6[%c0_10, %c0_11] : memref<32x384xf32, #tpu.memory_space<vmem>>, vector<32x384xf32>
    %cst_12 = arith.constant dense<0.000000e+00> : vector<8x32xf32>
    %11 = tpu.matmul %5, %10, %cst_12 {dimension_numbers = #tpu.dot_dimension_numbers<[1], [1], [0], [0], [0, 0, 1, 0], [], []>} : vector<8x384xf32>, vector<32x384xf32>, vector<8x32xf32> -> vector<8x32xf32>
    %c0_13 = arith.constant 0 : index
    %c0_14 = arith.constant 0 : index
    %12 = vector.load %arg7[%c0_13, %c0_14] : memref<1x32xf32, #tpu.memory_space<vmem>>, vector<1x32xf32>
    %13 = arith.addf %7, %9 : vector<8x32xf32>
    %14 = arith.addf %13, %11 : vector<8x32xf32>
    %15 = vector.broadcast %12 : vector<1x32xf32> to vector<8x32xf32>
    %16 = arith.addf %14, %15 : vector<8x32xf32>
    %cst_15 = arith.constant 0.000000e+00 : f32
    %17 = vector.broadcast %cst_15 : f32 to vector<8x32xf32>
    %18 = arith.maximumf %16, %17 : vector<8x32xf32>
    %19 = vector.broadcast %12 : vector<1x32xf32> to vector<8x32xf32>
    %20 = arith.addf %7, %19 : vector<8x32xf32>
    %cst_16 = arith.constant 0.000000e+00 : f32
    %21 = vector.broadcast %cst_16 : f32 to vector<8x32xf32>
    %22 = arith.maximumf %20, %21 : vector<8x32xf32>
    %23 = vector.broadcast %12 : vector<1x32xf32> to vector<8x32xf32>
    %24 = arith.addf %9, %23 : vector<8x32xf32>
    %cst_17 = arith.constant 0.000000e+00 : f32
    %25 = vector.broadcast %cst_17 : f32 to vector<8x32xf32>
    %26 = arith.maximumf %24, %25 : vector<8x32xf32>
    %27 = vector.broadcast %12 : vector<1x32xf32> to vector<8x32xf32>
    %28 = arith.addf %11, %27 : vector<8x32xf32>
    %cst_18 = arith.constant 0.000000e+00 : f32
    %29 = vector.broadcast %cst_18 : f32 to vector<8x32xf32>
    %30 = arith.maximumf %28, %29 : vector<8x32xf32>
    %31 = tpu.concatenate %18, %22, %26, %30 in 0 : vector<8x32xf32>, vector<8x32xf32>, vector<8x32xf32>, vector<8x32xf32> -> vector<32x32xf32>
    %c0_19 = arith.constant 0 : index
    %c0_20 = arith.constant 0 : index
    %32 = vector.load %arg10[%c0_19, %c0_20] : memref<32x32xf32, #tpu.memory_space<vmem>>, vector<32x32xf32>
    tpu.vector_store %arg10[%c0_19, %c0_20], %31 {strides = array<i32>} : memref<32x32xf32, #tpu.memory_space<vmem>>, vector<32x32xf32>,
    %c0_21 = arith.constant 0 : index
    %c0_22 = arith.constant 0 : index
    %33 = vector.load %arg8[%c0_21, %c0_22] : memref<32x4480xf32, #tpu.memory_space<vmem>>, vector<32x4480xf32>
    %cst_23 = arith.constant dense<0.000000e+00> : vector<32x4480xf32>
    %34 = tpu.matmul %31, %33, %cst_23 {dimension_numbers = #tpu.dot_dimension_numbers<[1], [0], [0], [1], [0, 0, 1, 1], [], []>} : vector<32x32xf32>, vector<32x4480xf32>, vector<32x4480xf32> -> vector<32x4480xf32>
    %c0_24 = arith.constant 0 : index
    %c0_25 = arith.constant 0 : index
    %35 = vector.load %arg9[%c0_24, %c0_25] : memref<1x4480xf32, #tpu.memory_space<vmem>>, vector<1x4480xf32>
    %36 = vector.broadcast %35 : vector<1x4480xf32> to vector<32x4480xf32>
    %37 = arith.addf %34, %36 : vector<32x4480xf32>
    %cst_26 = arith.constant 0.000000e+00 : f32
    %38 = vector.broadcast %cst_26 : f32 to vector<32x4480xf32>
    %39 = arith.maximumf %37, %38 : vector<32x4480xf32>
    %c0_27 = arith.constant 0 : index
    %c0_28 = arith.constant 0 : index
    %40 = vector.load %arg11[%c0_27, %c0_28] : memref<32x4480xf32, #tpu.memory_space<vmem>>, vector<32x4480xf32>
    tpu.vector_store %arg11[%c0_27, %c0_28], %39 {strides = array<i32>} : memref<32x4480xf32, #tpu.memory_space<vmem>>, vector<32x4480xf32>,
    return
  }
  func.func @transform_0(%arg0: i32) -> (i32, i32) {
    %c0_i32 = arith.constant 0 : i32
    %c0_i32_0 = arith.constant 0 : i32
    %c0_i32_1 = arith.constant 0 : i32
    return %c0_i32, %c0_i32_0 : i32, i32
  }
  func.func @transform_1(%arg0: i32) -> (i32, i32) {
    %c0_i32 = arith.constant 0 : i32
    %c0_i32_0 = arith.constant 0 : i32
    %c0_i32_1 = arith.constant 0 : i32
    return %c0_i32, %c0_i32_0 : i32, i32
  }
  func.func @transform_2(%arg0: i32) -> (i32, i32) {
    %c0_i32 = arith.constant 0 : i32
    %c0_i32_0 = arith.constant 0 : i32
    %c0_i32_1 = arith.constant 0 : i32
    return %c0_i32, %c0_i32_0 : i32, i32
  }
  func.func @transform_3(%arg0: i32) -> (i32, i32) {
    %c0_i32 = arith.constant 0 : i32
    %c0_i32_0 = arith.constant 0 : i32
    %c0_i32_1 = arith.constant 0 : i32
    return %c0_i32, %c0_i32_0 : i32, i32
  }
  func.func @transform_4(%arg0: i32) -> (i32, i32) {
    %c0_i32 = arith.constant 0 : i32
    %c0_i32_0 = arith.constant 0 : i32
    %c0_i32_1 = arith.constant 0 : i32
    return %c0_i32, %c0_i32_0 : i32, i32
  }
  func.func @transform_5(%arg0: i32) -> (i32, i32) {
    %c0_i32 = arith.constant 0 : i32
    %c0_i32_0 = arith.constant 0 : i32
    %c0_i32_1 = arith.constant 0 : i32
    return %c0_i32, %c0_i32_0 : i32, i32
  }
  func.func @transform_6(%arg0: i32) -> (i32, i32) {
    %c0_i32 = arith.constant 0 : i32
    %c0_i32_0 = arith.constant 0 : i32
    %c0_i32_1 = arith.constant 0 : i32
    return %c0_i32, %c0_i32_0 : i32, i32
  }
  func.func @transform_7(%arg0: i32) -> (i32, i32) {
    %c0_i32 = arith.constant 0 : i32
    %c0_i32_0 = arith.constant 0 : i32
    %c0_i32_1 = arith.constant 0 : i32
    return %c0_i32, %c0_i32_0 : i32, i32
  }
  func.func @transform_8(%arg0: i32) -> (i32, i32) {
    %c0_i32 = arith.constant 0 : i32
    %c0_i32_0 = arith.constant 0 : i32
    %c0_i32_1 = arith.constant 0 : i32
    return %c0_i32, %c0_i32_0 : i32, i32
  }
  func.func @transform_9(%arg0: i32) -> (i32, i32) {
    %c0_i32 = arith.constant 0 : i32
    %c0_i32_0 = arith.constant 0 : i32
    %c0_i32_1 = arith.constant 0 : i32
    return %c0_i32, %c0_i32_0 : i32, i32
  }
  func.func @transform_10(%arg0: i32) -> (i32, i32) {
    %c0_i32 = arith.constant 0 : i32
    %c0_i32_0 = arith.constant 0 : i32
    %c0_i32_1 = arith.constant 0 : i32
    return %c0_i32, %c0_i32_0 : i32, i32
  }
}

</mosaic_0001>

<llo_original>
// kernel: tpu_custom_call.1
$region0: #{tpu_custom_call.1}
  #allocation0 [shape = 'u32[]', space=smem, size = 0x4, offset = 0x4, fixed_abs, tag = 'smem constant byte address 0x4 - core index']
  #allocation1 [shape = 'u32[72,128]{1,0:T(1,128)}', space=vmem, size = 0x9000, scoped, tag = 'internal scratch']
  %s0 = inlined_call_operand.hbm [shape: bf16[8,1024], index: 0, kind: input, shape index: {}]
  %s1 = inlined_call_operand.hbm [shape: bf16[8,3328], index: 1, kind: input, shape index: {}]
  %s2 = inlined_call_operand.hbm [shape: bf16[8,384], index: 2, kind: input, shape index: {}]
  %s3 = inlined_call_operand.hbm [shape: f32[32,1024], index: 3, kind: input, shape index: {}]
  %s4 = inlined_call_operand.hbm [shape: f32[32,3328], index: 4, kind: input, shape index: {}]
  %s5 = inlined_call_operand.hbm [shape: f32[32,384], index: 5, kind: input, shape index: {}]
  %s6 = inlined_call_operand.vmem [shape: f32[1,32], index: 6, kind: input, shape index: {}]
  %s7 = inlined_call_operand.hbm [shape: f32[32,4480], index: 7, kind: input, shape index: {}]
  %s8 = inlined_call_operand.hbm [shape: f32[1,4480], index: 8, kind: input, shape index: {}]
  %s9 = inlined_call_operand.hbm [shape: f32[32,32], index: 9, kind: output, shape index: {0}]
  %s10 = inlined_call_operand.hbm [shape: f32[32,4480], index: 10, kind: output, shape index: {1}]
  %11 = xla_tuple %s9, %s10
  %s12 = sld [smem:[#allocation0]]
  $region86: #{tpu_custom_call.1} parent=0
    _
  %s14 = ssub.s32 1, %s12
  %s15 = scalar_select 0, %s14, %s12
  $region1: #{tpu_custom_call.1} parent=0
    #allocation2 [shape = 'u8[16384]{0}', space=vmem, size = 0x4000, scoped, tag = 'input window, operand 0, single buffered']
    #allocation3 [shape = 's32[1]{0}', space=sflag, size = 0x4, scoped, tag = 'scoped memory for tpu_custom_call.1']
    #allocation4 [shape = 's32[1]{0}', space=sflag, size = 0x4, scoped, tag = 'scoped memory for tpu_custom_call.1']
    #allocation5 [shape = 'u8[53248]{0}', space=vmem, size = 0xd000, scoped, tag = 'input window, operand 1, single buffered']
    #allocation6 [shape = 's32[1]{0}', space=sflag, size = 0x4, scoped, tag = 'scoped memory for tpu_custom_call.1']
    #allocation7 [shape = 'u8[6144]{0}', space=vmem, size = 0x1800, scoped, tag = 'input window, operand 2, single buffered']
    #allocation8 [shape = 'u8[131072]{0}', space=vmem, size = 0x20000, scoped, tag = 'input window, operand 3, single buffered']
    #allocation9 [shape = 's32[1]{0}', space=sflag, size = 0x4, scoped, tag = 'scoped memory for tpu_custom_call.1']
    #allocation10 [shape = 'u8[425984]{0}', space=vmem, size = 0x68000, scoped, tag = 'input window, operand 4, single buffered']
    #allocation11 [shape = 'u8[49152]{0}', space=vmem, size = 0xc000, scoped, tag = 'input window, operand 5, single buffered']
    #allocation12 [shape = 's32[1]{0}', space=sflag, size = 0x4, scoped, tag = 'scoped memory for tpu_custom_call.1']
    #allocation13 [shape = 'u8[573440]{0}', space=vmem, size = 0x8c000, scoped, tag = 'input window, operand 7, single buffered']
    #allocation14 [shape = 'u8[17920]{0}', space=vmem, size = 0x4800, scoped, tag = 'input window, operand 8, single buffered']
    #allocation15 [shape = 's32[1]{0}', space=sflag, size = 0x4, scoped, tag = 'scoped memory for tpu_custom_call.1']
    #allocation16 [shape = 'u8[16384]{0}', space=vmem, size = 0x4000, scoped, tag = 'output window, operand 0, single buffered']
    #allocation17 [shape = 'u8[573440]{0}', space=vmem, size = 0x8c000, scoped, tag = 'output window, operand 1, single buffered']
    #allocation18 [shape = 's32[1]{0}', space=sflag, size = 0x4, scoped, tag = 'scoped memory for tpu_custom_call.1']
    %16 = vsyncpa [#allocation3], 0
    %17 = vsyncpa [#allocation6], 0
    %18 = vsyncpa [#allocation9], 0
    %19 = vsyncpa [#allocation12], 0
    %20 = vsyncpa [#allocation15], 0
    %21 = vsyncpa [#allocation4], 0
    %22 = vsyncpa [#allocation18], 0
    // Predicated region
    $region2: #{tpu_custom_call.1} parent=1 // pred_check
      _
    $region3: #{tpu_custom_call.1} parent=1 // pred_check_branch
      %24 = sbr.rel (0) target = $region5
    $region4: #{tpu_custom_call.1} parent=1 // pred_region
      %26 = vsyncadd [#allocation3], 0
      %s28 = sshll.u32 %s0, 4
      %s29 = int_to_ptr.hbm [resolvable:$true] %s28
      %s30 = sshll.u32 [#allocation2], 4
      %s31 = int_to_ptr.vmem [resolvable:$true] %s30
      %33 = dma.hbm_to_vmem [thread:$0]  %s29, 512, %s31, [#allocation3]
    $region5: #{tpu_custom_call.1} parent=1 // pred_fallthru
      _
    // Predicated region
    $region6: #{tpu_custom_call.1} parent=1 // pred_check
      _
    $region7: #{tpu_custom_call.1} parent=1 // pred_check_branch
      %35 = sbr.rel (0) target = $region9
    $region8: #{tpu_custom_call.1} parent=1 // pred_region
      %37 = vsyncadd [#allocation6], 0
      %s39 = sshll.u32 %s1, 4
      %s40 = int_to_ptr.hbm [resolvable:$true] %s39
      %s41 = sshll.u32 [#allocation5], 4
      %s42 = int_to_ptr.vmem [resolvable:$true] %s41
      %44 = dma.hbm_to_vmem [thread:$0]  %s40, 1664, %s42, [#allocation6]
    $region9: #{tpu_custom_call.1} parent=1 // pred_fallthru
      _
    // Predicated region
    $region10: #{tpu_custom_call.1} parent=1 // pred_check
      _
    $region11: #{tpu_custom_call.1} parent=1 // pred_check_branch
      %46 = sbr.rel (0) target = $region13
    $region12: #{tpu_custom_call.1} parent=1 // pred_region
      %48 = vsyncadd [#allocation6], 0
      %s50 = sshll.u32 %s2, 4
      %s51 = int_to_ptr.hbm [resolvable:$true] %s50
      %s52 = sshll.u32 [#allocation7], 4
      %s53 = int_to_ptr.vmem [resolvable:$true] %s52
      %55 = dma.hbm_to_vmem [thread:$0]  %s51, 192, %s53, [#allocation6]
    $region13: #{tpu_custom_call.1} parent=1 // pred_fallthru
      _
    // Predicated region
    $region14: #{tpu_custom_call.1} parent=1 // pred_check
      _
    $region15: #{tpu_custom_call.1} parent=1 // pred_check_branch
      %57 = sbr.rel (0) target = $region17
    $region16: #{tpu_custom_call.1} parent=1 // pred_region
      %59 = vsyncadd [#allocation9], 0
      %s60 = sshll.u32 %s3, 4
      %s61 = int_to_ptr.hbm [resolvable:$true] %s60
      %s62 = sshll.u32 [#allocation8], 4
      %s63 = int_to_ptr.vmem [resolvable:$true] %s62
      %68 = dma.hbm_to_vmem [thread:$0]  %s61, 4096, %s63, [#allocation9], 1024, 1024, 64
    $region17: #{tpu_custom_call.1} parent=1 // pred_fallthru
      _
    // Predicated region
    $region18: #{tpu_custom_call.1} parent=1 // pred_check
      _
    $region19: #{tpu_custom_call.1} parent=1 // pred_check_branch
      %70 = sbr.rel (0) target = $region21
    $region20: #{tpu_custom_call.1} parent=1 // pred_region
      %72 = vsyncadd [#allocation9], 0
      %s73 = sshll.u32 %s4, 4
      %s74 = int_to_ptr.hbm [resolvable:$true] %s73
      %s75 = sshll.u32 [#allocation10], 4
      %s76 = int_to_ptr.vmem [resolvable:$true] %s75
      %81 = dma.hbm_to_vmem [thread:$0]  %s74, 13312, %s76, [#allocation9], 3328, 3328, 208
    $region21: #{tpu_custom_call.1} parent=1 // pred_fallthru
      _
    // Predicated region
    $region22: #{tpu_custom_call.1} parent=1 // pred_check
      _
    $region23: #{tpu_custom_call.1} parent=1 // pred_check_branch
      %83 = sbr.rel (0) target = $region25
    $region24: #{tpu_custom_call.1} parent=1 // pred_region
      %85 = vsyncadd [#allocation12], 0
      %s86 = sshll.u32 %s5, 4
      %s87 = int_to_ptr.hbm [resolvable:$true] %s86
      %s88 = sshll.u32 [#allocation11], 4
      %s89 = int_to_ptr.vmem [resolvable:$true] %s88
      %94 = dma.hbm_to_vmem [thread:$0]  %s87, 1536, %s89, [#allocation12], 384, 384, 24
    $region25: #{tpu_custom_call.1} parent=1 // pred_fallthru
      _
    // Predicated region
    $region26: #{tpu_custom_call.1} parent=1 // pred_check
      _
    $region27: #{tpu_custom_call.1} parent=1 // pred_check_branch
      %96 = sbr.rel (0) target = $region29
    $region28: #{tpu_custom_call.1} parent=1 // pred_region
      _
    $region29: #{tpu_custom_call.1} parent=1 // pred_fallthru
      _
    // Predicated region
    $region30: #{tpu_custom_call.1} parent=1 // pred_check
      _
    $region31: #{tpu_custom_call.1} parent=1 // pred_check_branch
      %98 = sbr.rel (0) target = $region33
    $region32: #{tpu_custom_call.1} parent=1 // pred_region
      %100 = vsyncadd [#allocation12], 0
      %s101 = sshll.u32 %s7, 4
      %s102 = int_to_ptr.hbm [resolvable:$true] %s101
      %s103 = sshll.u32 [#allocation13], 4
      %s104 = int_to_ptr.vmem [resolvable:$true] %s103
      %109 = dma.hbm_to_vmem [thread:$0]  %s102, 17920, %s104, [#allocation12], 4480, 4480, 280
    $region33: #{tpu_custom_call.1} parent=1 // pred_fallthru
      _
    // Predicated region
    $region34: #{tpu_custom_call.1} parent=1 // pred_check
      _
    $region35: #{tpu_custom_call.1} parent=1 // pred_check_branch
      %111 = sbr.rel (0) target = $region37
    $region36: #{tpu_custom_call.1} parent=1 // pred_region
      %113 = vsyncadd [#allocation15], 0
      %s115 = sshll.u32 %s8, 4
      %s116 = int_to_ptr.hbm [resolvable:$true] %s115
      %s117 = sshll.u32 [#allocation14], 4
      %s118 = int_to_ptr.vmem [resolvable:$true] %s117
      %120 = dma.hbm_to_vmem [thread:$0]  %s116, 560, %s118, [#allocation15]
    $region37: #{tpu_custom_call.1} parent=1 // pred_fallthru
      _
    // Predicated region
    $region38: #{tpu_custom_call.1} parent=1 // pred_check
      _
    $region39: #{tpu_custom_call.1} parent=1 // pred_check_branch
      %122 = sbr.rel (0) target = $region41
    $region40: #{tpu_custom_call.1} parent=1 // pred_region
      %124 = dma.done [#allocation3], 512
    $region41: #{tpu_custom_call.1} parent=1 // pred_fallthru
      _
    // Predicated region
    $region42: #{tpu_custom_call.1} parent=1 // pred_check
      _
    $region43: #{tpu_custom_call.1} parent=1 // pred_check_branch
      %126 = sbr.rel (0) target = $region45
    $region44: #{tpu_custom_call.1} parent=1 // pred_region
      %128 = dma.done [#allocation6], 1664
    $region45: #{tpu_custom_call.1} parent=1 // pred_fallthru
      _
    // Predicated region
    $region46: #{tpu_custom_call.1} parent=1 // pred_check
      _
    $region47: #{tpu_custom_call.1} parent=1 // pred_check_branch
      %130 = sbr.rel (0) target = $region49
    $region48: #{tpu_custom_call.1} parent=1 // pred_region
      %132 = dma.done [#allocation6], 192
    $region49: #{tpu_custom_call.1} parent=1 // pred_fallthru
      _
    // Predicated region
    $region50: #{tpu_custom_call.1} parent=1 // pred_check
      _
    $region51: #{tpu_custom_call.1} parent=1 // pred_check_branch
      %134 = sbr.rel (0) target = $region53
    $region52: #{tpu_custom_call.1} parent=1 // pred_region
      %136 = dma.done [#allocation9], 4096
    $region53: #{tpu_custom_call.1} parent=1 // pred_fallthru
      _
    // Predicated region
    $region54: #{tpu_custom_call.1} parent=1 // pred_check
      _
    $region55: #{tpu_custom_call.1} parent=1 // pred_check_branch
      %138 = sbr.rel (0) target = $region57
    $region56: #{tpu_custom_call.1} parent=1 // pred_region
      %140 = dma.done [#allocation9], 13312
    $region57: #{tpu_custom_call.1} parent=1 // pred_fallthru
      _
    // Predicated region
    $region58: #{tpu_custom_call.1} parent=1 // pred_check
      _
    $region59: #{tpu_custom_call.1} parent=1 // pred_check_branch
      %142 = sbr.rel (0) target = $region61
    $region60: #{tpu_custom_call.1} parent=1 // pred_region
      %144 = dma.done [#allocation12], 1536
    $region61: #{tpu_custom_call.1} parent=1 // pred_fallthru
      _
    // Predicated region
    $region62: #{tpu_custom_call.1} parent=1 // pred_check
      _
    $region63: #{tpu_custom_call.1} parent=1 // pred_check_branch
      %146 = sbr.rel (0) target = $region65
    $region64: #{tpu_custom_call.1} parent=1 // pred_region
      %148 = dma.done [#allocation12], 17920
    $region65: #{tpu_custom_call.1} parent=1 // pred_fallthru
      _
    // Predicated region
    $region66: #{tpu_custom_call.1} parent=1 // pred_check
      _
    $region67: #{tpu_custom_call.1} parent=1 // pred_check_branch
      %150 = sbr.rel (0) target = $region69
    $region68: #{tpu_custom_call.1} parent=1 // pred_region
      %152 = dma.done [#allocation15], 560
    $region69: #{tpu_custom_call.1} parent=1 // pred_fallthru
      _
    %v153 = vld [vmem:[#allocation2] sm:$0xff]
    %v154 = vld [vmem:[#allocation2 + $0x8] sm:$0xff]
    %v155 = vld [vmem:[#allocation2 + $0x10] sm:$0xff]
    %v156 = vld [vmem:[#allocation2 + $0x18] sm:$0xff]
    %v157 = vunpack.c.l.bf16 %v153
    %v158 = vunpack.c.h.bf16 %v153
    %v159 = vunpack.c.l.bf16 %v154
    %v160 = vunpack.c.h.bf16 %v154
    %v161 = vunpack.c.l.bf16 %v155
    %v162 = vunpack.c.h.bf16 %v155
    %v163 = vunpack.c.l.bf16 %v156
    %v164 = vunpack.c.h.bf16 %v156
    %v165 = vld [vmem:[#allocation5] sm:$0xff]
    %v166 = vld [vmem:[#allocation5 + $0x8] sm:$0xff]
    %v167 = vld [vmem:[#allocation5 + $0x10] sm:$0xff]
    %v168 = vld [vmem:[#allocation5 + $0x18] sm:$0xff]
    %v169 = vld [vmem:[#allocation5 + $0x20] sm:$0xff]
    %v170 = vld [vmem:[#allocation5 + $0x28] sm:$0xff]
    %v171 = vld [vmem:[#allocation5 + $0x30] sm:$0xff]
    %v172 = vld [vmem:[#allocation5 + $0x38] sm:$0xff]
    %v173 = vld [vmem:[#allocation5 + $0x40] sm:$0xff]
    %v174 = vld [vmem:[#allocation5 + $0x48] sm:$0xff]
    %v175 = vld [vmem:[#allocation5 + $0x50] sm:$0xff]
    %v176 = vld [vmem:[#allocation5 + $0x58] sm:$0xff]
    %v177 = vld [vmem:[#allocation5 + $0x60] sm:$0xff]
    %v178 = vunpack.c.l.bf16 %v165
    %v179 = vunpack.c.h.bf16 %v165
    %v180 = vunpack.c.l.bf16 %v166
    %v181 = vunpack.c.h.bf16 %v166
    %v182 = vunpack.c.l.bf16 %v167
    %v183 = vunpack.c.h.bf16 %v167
    %v184 = vunpack.c.l.bf16 %v168
    %v185 = vunpack.c.h.bf16 %v168
    %v186 = vunpack.c.l.bf16 %v169
    %v187 = vunpack.c.h.bf16 %v169
    %v188 = vunpack.c.l.bf16 %v170
    %v189 = vunpack.c.h.bf16 %v170
    %v190 = vunpack.c.l.bf16 %v171
    %v191 = vunpack.c.h.bf16 %v171
    %v192 = vunpack.c.l.bf16 %v172
    %v193 = vunpack.c.h.bf16 %v172
    %v194 = vunpack.c.l.bf16 %v173
    %v195 = vunpack.c.h.bf16 %v173
    %v196 = vunpack.c.l.bf16 %v174
    %v197 = vunpack.c.h.bf16 %v174
    %v198 = vunpack.c.l.bf16 %v175
    %v199 = vunpack.c.h.bf16 %v175
    %v200 = vunpack.c.l.bf16 %v176
    %v201 = vunpack.c.h.bf16 %v176
    %v202 = vunpack.c.l.bf16 %v177
    %v203 = vunpack.c.h.bf16 %v177
    %v204 = vld [vmem:[#allocation7] sm:$0xff]
    %v205 = vld [vmem:[#allocation7 + $0x8] sm:$0xf]
    %v206 = vunpack.c.l.bf16 %v204
    %v207 = vunpack.c.h.bf16 %v204
    %v208 = vunpack.c.l.bf16 %v205
    %v209 = vld [vmem:[#allocation8] sm:$0xff]
    %v210 = vld [vmem:[#allocation8 + $0x8] sm:$0xff]
    %v211 = vld [vmem:[#allocation8 + $0x10] sm:$0xff]
    %v212 = vld [vmem:[#allocation8 + $0x18] sm:$0xff]
    %v213 = vld [vmem:[#allocation8 + $0x20] sm:$0xff]
    %v214 = vld [vmem:[#allocation8 + $0x28] sm:$0xff]
    %v215 = vld [vmem:[#allocation8 + $0x30] sm:$0xff]
    %v216 = vld [vmem:[#allocation8 + $0x38] sm:$0xff]
    %v217 = vld [vmem:[#allocation8 + $0x40] sm:$0xff]
    %v218 = vld [vmem:[#allocation8 + $0x48] sm:$0xff]
    %v219 = vld [vmem:[#allocation8 + $0x50] sm:$0xff]
    %v220 = vld [vmem:[#allocation8 + $0x58] sm:$0xff]
    %v221 = vld [vmem:[#allocation8 + $0x60] sm:$0xff]
    %v222 = vld [vmem:[#allocation8 + $0x68] sm:$0xff]
    %v223 = vld [vmem:[#allocation8 + $0x70] sm:$0xff]
    %v224 = vld [vmem:[#allocation8 + $0x78] sm:$0xff]
    %v225 = vld [vmem:[#allocation8 + $0x80] sm:$0xff]
    %v226 = vld [vmem:[#allocation8 + $0x88] sm:$0xff]
    %v227 = vld [vmem:[#allocation8 + $0x90] sm:$0xff]
    %v228 = vld [vmem:[#allocation8 + $0x98] sm:$0xff]
    %v229 = vld [vmem:[#allocation8 + $0xa0] sm:$0xff]
    %v230 = vld [vmem:[#allocation8 + $0xa8] sm:$0xff]
    %v231 = vld [vmem:[#allocation8 + $0xb0] sm:$0xff]
    %v232 = vld [vmem:[#allocation8 + $0xb8] sm:$0xff]
    %v233 = vld [vmem:[#allocation8 + $0xc0] sm:$0xff]
    %v234 = vld [vmem:[#allocation8 + $0xc8] sm:$0xff]
    %v235 = vld [vmem:[#allocation8 + $0xd0] sm:$0xff]
    %v236 = vld [vmem:[#allocation8 + $0xd8] sm:$0xff]
    %v237 = vld [vmem:[#allocation8 + $0xe0] sm:$0xff]
    %v238 = vld [vmem:[#allocation8 + $0xe8] sm:$0xff]
    %v239 = vld [vmem:[#allocation8 + $0xf0] sm:$0xff]
    %v240 = vld [vmem:[#allocation8 + $0xf8] sm:$0xff]
    %241 = vmatpush.xpose.msra.mxu0 0.0
    %242 = vmatpush.xpose.msra.mxu0 0.0
    %243 = vmatpush.xpose.msra.mxu0 0.0
    %244 = vmatpush.xpose.msra.mxu0 0.0
    %245 = vmatpush.xpose.msra.mxu0 0.0
    %246 = vmatpush.xpose.msra.mxu0 0.0
    %247 = vmatpush.xpose.msra.mxu0 0.0
    %248 = vmatpush.xpose.msra.mxu0 0.0
    %249 = vmatpush.xpose.msra.mxu0 0.0
    %250 = vmatpush.xpose.msra.mxu0 0.0
    %251 = vmatpush.xpose.msra.mxu0 0.0
    %252 = vmatpush.xpose.msra.mxu0 0.0
    %253 = vmatpush.xpose.msra.mxu0 %v233
    %254 = vmatpush.xpose.msra.mxu0 %v225
    %255 = vmatpush.xpose.msra.mxu0 %v217
    %256 = vmatpush.xpose.msra.mxu0 %v209
    %257 = vmatmul.f32.gmra.mxu0 %v157
    %v258 = vpop.f32.mrf.mxu0
    %v259 = vadd.f32 0.0, %v258
    %260 = vdwg.mxu0
    %261 = vmatpush.xpose.msra.mxu0 0.0
    %262 = vmatpush.xpose.msra.mxu0 0.0
    %263 = vmatpush.xpose.msra.mxu0 0.0
    %264 = vmatpush.xpose.msra.mxu0 0.0
    %265 = vmatpush.xpose.msra.mxu0 0.0
    %266 = vmatpush.xpose.msra.mxu0 0.0
    %267 = vmatpush.xpose.msra.mxu0 0.0
    %268 = vmatpush.xpose.msra.mxu0 0.0
    %269 = vmatpush.xpose.msra.mxu0 0.0
    %270 = vmatpush.xpose.msra.mxu0 0.0
    %271 = vmatpush.xpose.msra.mxu0 0.0
    %272 = vmatpush.xpose.msra.mxu0 0.0
    %273 = vmatpush.xpose.msra.mxu0 %v234
    %274 = vmatpush.xpose.msra.mxu0 %v226
    %275 = vmatpush.xpose.msra.mxu0 %v218
    %276 = vmatpush.xpose.msra.mxu0 %v210
    %277 = vmatmul.f32.gmra.mxu0 %v158
    %v278 = vpop.f32.mrf.mxu0
    %v279 = vadd.f32 %v259, %v278
    %280 = vdwg.mxu0
    %281 = vmatpush.xpose.msra.mxu0 0.0
    %282 = vmatpush.xpose.msra.mxu0 0.0
    %283 = vmatpush.xpose.msra.mxu0 0.0
    %284 = vmatpush.xpose.msra.mxu0 0.0
    %285 = vmatpush.xpose.msra.mxu0 0.0
    %286 = vmatpush.xpose.msra.mxu0 0.0
    %287 = vmatpush.xpose.msra.mxu0 0.0
    %288 = vmatpush.xpose.msra.mxu0 0.0
    %289 = vmatpush.xpose.msra.mxu0 0.0
    %290 = vmatpush.xpose.msra.mxu0 0.0
    %291 = vmatpush.xpose.msra.mxu0 0.0
    %292 = vmatpush.xpose.msra.mxu0 0.0
    %293 = vmatpush.xpose.msra.mxu0 %v235
    %294 = vmatpush.xpose.msra.mxu0 %v227
    %295 = vmatpush.xpose.msra.mxu0 %v219
    %296 = vmatpush.xpose.msra.mxu0 %v211
    %297 = vmatmul.f32.gmra.mxu0 %v159
    %v298 = vpop.f32.mrf.mxu0
    %v299 = vadd.f32 %v279, %v298
    %300 = vdwg.mxu0
    %301 = vmatpush.xpose.msra.mxu0 0.0
    %302 = vmatpush.xpose.msra.mxu0 0.0
    %303 = vmatpush.xpose.msra.mxu0 0.0
    %304 = vmatpush.xpose.msra.mxu0 0.0
    %305 = vmatpush.xpose.msra.mxu0 0.0
    %306 = vmatpush.xpose.msra.mxu0 0.0
    %307 = vmatpush.xpose.msra.mxu0 0.0
    %308 = vmatpush.xpose.msra.mxu0 0.0
    %309 = vmatpush.xpose.msra.mxu0 0.0
    %310 = vmatpush.xpose.msra.mxu0 0.0
    %311 = vmatpush.xpose.msra.mxu0 0.0
    %312 = vmatpush.xpose.msra.mxu0 0.0
    %313 = vmatpush.xpose.msra.mxu0 %v236
    %314 = vmatpush.xpose.msra.mxu0 %v228
    %315 = vmatpush.xpose.msra.mxu0 %v220
    %316 = vmatpush.xpose.msra.mxu0 %v212
    %317 = vmatmul.f32.gmra.mxu0 %v160
    %v318 = vpop.f32.mrf.mxu0
    %v319 = vadd.f32 %v299, %v318
    %320 = vdwg.mxu0
    %321 = vmatpush.xpose.msra.mxu0 0.0
    %322 = vmatpush.xpose.msra.mxu0 0.0
    %323 = vmatpush.xpose.msra.mxu0 0.0
    %324 = vmatpush.xpose.msra.mxu0 0.0
    %325 = vmatpush.xpose.msra.mxu0 0.0
    %326 = vmatpush.xpose.msra.mxu0 0.0
    %327 = vmatpush.xpose.msra.mxu0 0.0
    %328 = vmatpush.xpose.msra.mxu0 0.0
    %329 = vmatpush.xpose.msra.mxu0 0.0
    %330 = vmatpush.xpose.msra.mxu0 0.0
    %331 = vmatpush.xpose.msra.mxu0 0.0
    %332 = vmatpush.xpose.msra.mxu0 0.0
    %333 = vmatpush.xpose.msra.mxu0 %v237
    %334 = vmatpush.xpose.msra.mxu0 %v229
    %335 = vmatpush.xpose.msra.mxu0 %v221
    %336 = vmatpush.xpose.msra.mxu0 %v213
    %337 = vmatmul.f32.gmra.mxu0 %v161
    %v338 = vpop.f32.mrf.mxu0
    %v339 = vadd.f32 %v319, %v338
    %340 = vdwg.mxu0
    %341 = vmatpush.xpose.msra.mxu0 0.0
    %342 = vmatpush.xpose.msra.mxu0 0.0
    %343 = vmatpush.xpose.msra.mxu0 0.0
    %344 = vmatpush.xpose.msra.mxu0 0.0
    %345 = vmatpush.xpose.msra.mxu0 0.0
    %346 = vmatpush.xpose.msra.mxu0 0.0
    %347 = vmatpush.xpose.msra.mxu0 0.0
    %348 = vmatpush.xpose.msra.mxu0 0.0
    %349 = vmatpush.xpose.msra.mxu0 0.0
    %350 = vmatpush.xpose.msra.mxu0 0.0
    %351 = vmatpush.xpose.msra.mxu0 0.0
    %352 = vmatpush.xpose.msra.mxu0 0.0
    %353 = vmatpush.xpose.msra.mxu0 %v238
    %354 = vmatpush.xpose.msra.mxu0 %v230
    %355 = vmatpush.xpose.msra.mxu0 %v222
    %356 = vmatpush.xpose.msra.mxu0 %v214
    %357 = vmatmul.f32.gmra.mxu0 %v162
    %v358 = vpop.f32.mrf.mxu0
    %v359 = vadd.f32 %v339, %v358
    %360 = vdwg.mxu0
    %361 = vmatpush.xpose.msra.mxu0 0.0
    %362 = vmatpush.xpose.msra.mxu0 0.0
    %363 = vmatpush.xpose.msra.mxu0 0.0
    %364 = vmatpush.xpose.msra.mxu0 0.0
    %365 = vmatpush.xpose.msra.mxu0 0.0
    %366 = vmatpush.xpose.msra.mxu0 0.0
    %367 = vmatpush.xpose.msra.mxu0 0.0
    %368 = vmatpush.xpose.msra.mxu0 0.0
    %369 = vmatpush.xpose.msra.mxu0 0.0
    %370 = vmatpush.xpose.msra.mxu0 0.0
    %371 = vmatpush.xpose.msra.mxu0 0.0
    %372 = vmatpush.xpose.msra.mxu0 0.0
    %373 = vmatpush.xpose.msra.mxu0 %v239
    %374 = vmatpush.xpose.msra.mxu0 %v231
    %375 = vmatpush.xpose.msra.mxu0 %v223
    %376 = vmatpush.xpose.msra.mxu0 %v215
    %377 = vmatmul.f32.gmra.mxu0 %v163
    %v378 = vpop.f32.mrf.mxu0
    %v379 = vadd.f32 %v359, %v378
    %380 = vdwg.mxu0
    %381 = vmatpush.xpose.msra.mxu0 0.0
    %382 = vmatpush.xpose.msra.mxu0 0.0
    %383 = vmatpush.xpose.msra.mxu0 0.0
    %384 = vmatpush.xpose.msra.mxu0 0.0
    %385 = vmatpush.xpose.msra.mxu0 0.0
    %386 = vmatpush.xpose.msra.mxu0 0.0
    %387 = vmatpush.xpose.msra.mxu0 0.0
    %388 = vmatpush.xpose.msra.mxu0 0.0
    %389 = vmatpush.xpose.msra.mxu0 0.0
    %390 = vmatpush.xpose.msra.mxu0 0.0
    %391 = vmatpush.xpose.msra.mxu0 0.0
    %392 = vmatpush.xpose.msra.mxu0 0.0
    %393 = vmatpush.xpose.msra.mxu0 %v240
    %394 = vmatpush.xpose.msra.mxu0 %v232
    %395 = vmatpush.xpose.msra.mxu0 %v224
    %396 = vmatpush.xpose.msra.mxu0 %v216
    %397 = vmatmul.f32.gmra.mxu0 %v164
    %v398 = vpop.f32.mrf.mxu0
    %v399 = vadd.f32 %v379, %v398
    %400 = vdwg.mxu0
    %v401 = vld [vmem:[#allocation10] sm:$0xff]
    %v402 = vld [vmem:[#allocation10 + $0x8] sm:$0xff]
    %v403 = vld [vmem:[#allocation10 + $0x10] sm:$0xff]
    %v404 = vld [vmem:[#allocation10 + $0x18] sm:$0xff]
    %v405 = vld [vmem:[#allocation10 + $0x20] sm:$0xff]
    %v406 = vld [vmem:[#allocation10 + $0x28] sm:$0xff]
    %v407 = vld [vmem:[#allocation10 + $0x30] sm:$0xff]
    %v408 = vld [vmem:[#allocation10 + $0x38] sm:$0xff]
    %v409 = vld [vmem:[#allocation10 + $0x40] sm:$0xff]
    %v410 = vld [vmem:[#allocation10 + $0x48] sm:$0xff]
    %v411 = vld [vmem:[#allocation10 + $0x50] sm:$0xff]
    %v412 = vld [vmem:[#allocation10 + $0x58] sm:$0xff]
    %v413 = vld [vmem:[#allocation10 + $0x60] sm:$0xff]
    %v414 = vld [vmem:[#allocation10 + $0x68] sm:$0xff]
    %v415 = vld [vmem:[#allocation10 + $0x70] sm:$0xff]
    %v416 = vld [vmem:[#allocation10 + $0x78] sm:$0xff]
    %v417 = vld [vmem:[#allocation10 + $0x80] sm:$0xff]
    %v418 = vld [vmem:[#allocation10 + $0x88] sm:$0xff]
    %v419 = vld [vmem:[#allocation10 + $0x90] sm:$0xff]
    %v420 = vld [vmem:[#allocation10 + $0x98] sm:$0xff]
    %v421 = vld [vmem:[#allocation10 + $0xa0] sm:$0xff]
    %v422 = vld [vmem:[#allocation10 + $0xa8] sm:$0xff]
    %v423 = vld [vmem:[#allocation10 + $0xb0] sm:$0xff]
    %v424 = vld [vmem:[#allocation10 + $0xb8] sm:$0xff]
    %v425 = vld [vmem:[#allocation10 + $0xc0] sm:$0xff]
    %v426 = vld [vmem:[#allocation10 + $0xc8] sm:$0xff]
    %v427 = vld [vmem:[#allocation10 + $0xd0] sm:$0xff]
    %v428 = vld [vmem:[#allocation10 + $0xd8] sm:$0xff]
    %v429 = vld [vmem:[#allocation10 + $0xe0] sm:$0xff]
    %v430 = vld [vmem:[#allocation10 + $0xe8] sm:$0xff]
    %v431 = vld [vmem:[#allocation10 + $0xf0] sm:$0xff]
    %v432 = vld [vmem:[#allocation10 + $0xf8] sm:$0xff]
    %v433 = vld [vmem:[#allocation10 + $0x100] sm:$0xff]
    %v434 = vld [vmem:[#allocation10 + $0x108] sm:$0xff]
    %v435 = vld [vmem:[#allocation10 + $0x110] sm:$0xff]
    %v436 = vld [vmem:[#allocation10 + $0x118] sm:$0xff]
    %v437 = vld [vmem:[#allocation10 + $0x120] sm:$0xff]
    %v438 = vld [vmem:[#allocation10 + $0x128] sm:$0xff]
    %v439 = vld [vmem:[#allocation10 + $0x130] sm:$0xff]
    %v440 = vld [vmem:[#allocation10 + $0x138] sm:$0xff]
    %v441 = vld [vmem:[#allocation10 + $0x140] sm:$0xff]
    %v442 = vld [vmem:[#allocation10 + $0x148] sm:$0xff]
    %v443 = vld [vmem:[#allocation10 + $0x150] sm:$0xff]
    %v444 = vld [vmem:[#allocation10 + $0x158] sm:$0xff]
    %v445 = vld [vmem:[#allocation10 + $0x160] sm:$0xff]
    %v446 = vld [vmem:[#allocation10 + $0x168] sm:$0xff]
    %v447 = vld [vmem:[#allocation10 + $0x170] sm:$0xff]
    %v448 = vld [vmem:[#allocation10 + $0x178] sm:$0xff]
    %v449 = vld [vmem:[#allocation10 + $0x180] sm:$0xff]
    %v450 = vld [vmem:[#allocation10 + $0x188] sm:$0xff]
    %v451 = vld [vmem:[#allocation10 + $0x190] sm:$0xff]
    %v452 = vld [vmem:[#allocation10 + $0x198] sm:$0xff]
    %v453 = vld [vmem:[#allocation10 + $0x1a0] sm:$0xff]
    %v454 = vld [vmem:[#allocation10 + $0x1a8] sm:$0xff]
    %v455 = vld [vmem:[#allocation10 + $0x1b0] sm:$0xff]
    %v456 = vld [vmem:[#allocation10 + $0x1b8] sm:$0xff]
    %v457 = vld [vmem:[#allocation10 + $0x1c0] sm:$0xff]
    %v458 = vld [vmem:[#allocation10 + $0x1c8] sm:$0xff]
    %v459 = vld [vmem:[#allocation10 + $0x1d0] sm:$0xff]
    %v460 = vld [vmem:[#allocation10 + $0x1d8] sm:$0xff]
    %v461 = vld [vmem:[#allocation10 + $0x1e0] sm:$0xff]
    %v462 = vld [vmem:[#allocation10 + $0x1e8] sm:$0xff]
    %v463 = vld [vmem:[#allocation10 + $0x1f0] sm:$0xff]
    %v464 = vld [vmem:[#allocation10 + $0x1f8] sm:$0xff]
    %v465 = vld [vmem:[#allocation10 + $0x200] sm:$0xff]
    %v466 = vld [vmem:[#allocation10 + $0x208] sm:$0xff]
    %v467 = vld [vmem:[#allocation10 + $0x210] sm:$0xff]
    %v468 = vld [vmem:[#allocation10 + $0x218] sm:$0xff]
    %v469 = vld [vmem:[#allocation10 + $0x220] sm:$0xff]
    %v470 = vld [vmem:[#allocation10 + $0x228] sm:$0xff]
    %v471 = vld [vmem:[#allocation10 + $0x230] sm:$0xff]
    %v472 = vld [vmem:[#allocation10 + $0x238] sm:$0xff]
    %v473 = vld [vmem:[#allocation10 + $0x240] sm:$0xff]
    %v474 = vld [vmem:[#allocation10 + $0x248] sm:$0xff]
    %v475 = vld [vmem:[#allocation10 + $0x250] sm:$0xff]
    %v476 = vld [vmem:[#allocation10 + $0x258] sm:$0xff]
    %v477 = vld [vmem:[#allocation10 + $0x260] sm:$0xff]
    %v478 = vld [vmem:[#allocation10 + $0x268] sm:$0xff]
    %v479 = vld [vmem:[#allocation10 + $0x270] sm:$0xff]
    %v480 = vld [vmem:[#allocation10 + $0x278] sm:$0xff]
    %v481 = vld [vmem:[#allocation10 + $0x280] sm:$0xff]
    %v482 = vld [vmem:[#allocation10 + $0x288] sm:$0xff]
    %v483 = vld [vmem:[#allocation10 + $0x290] sm:$0xff]
    %v484 = vld [vmem:[#allocation10 + $0x298] sm:$0xff]
    %v485 = vld [vmem:[#allocation10 + $0x2a0] sm:$0xff]
    %v486 = vld [vmem:[#allocation10 + $0x2a8] sm:$0xff]
    %v487 = vld [vmem:[#allocation10 + $0x2b0] sm:$0xff]
    %v488 = vld [vmem:[#allocation10 + $0x2b8] sm:$0xff]
    %v489 = vld [vmem:[#allocation10 + $0x2c0] sm:$0xff]
    %v490 = vld [vmem:[#allocation10 + $0x2c8] sm:$0xff]
    %v491 = vld [vmem:[#allocation10 + $0x2d0] sm:$0xff]
    %v492 = vld [vmem:[#allocation10 + $0x2d8] sm:$0xff]
    %v493 = vld [vmem:[#allocation10 + $0x2e0] sm:$0xff]
    %v494 = vld [vmem:[#allocation10 + $0x2e8] sm:$0xff]
    %v495 = vld [vmem:[#allocation10 + $0x2f0] sm:$0xff]
    %v496 = vld [vmem:[#allocation10 + $0x2f8] sm:$0xff]
    %v497 = vld [vmem:[#allocation10 + $0x300] sm:$0xff]
    %v498 = vld [vmem:[#allocation10 + $0x308] sm:$0xff]
    %v499 = vld [vmem:[#allocation10 + $0x310] sm:$0xff]
    %v500 = vld [vmem:[#allocation10 + $0x318] sm:$0xff]
    %v501 = vld [vmem:[#allocation10 + $0x320] sm:$0xff]
    %v502 = vld [vmem:[#allocation10 + $0x328] sm:$0xff]
    %v503 = vld [vmem:[#allocation10 + $0x330] sm:$0xff]
    %v504 = vld [vmem:[#allocation10 + $0x338] sm:$0xff]
    %505 = vmatpush.xpose.msra.mxu0 0.0
    %506 = vmatpush.xpose.msra.mxu0 0.0
    %507 = vmatpush.xpose.msra.mxu0 0.0
    %508 = vmatpush.xpose.msra.mxu0 0.0
    %509 = vmatpush.xpose.msra.mxu0 0.0
    %510 = vmatpush.xpose.msra.mxu0 0.0
    %511 = vmatpush.xpose.msra.mxu0 0.0
    %512 = vmatpush.xpose.msra.mxu0 0.0
    %513 = vmatpush.xpose.msra.mxu0 0.0
    %514 = vmatpush.xpose.msra.mxu0 0.0
    %515 = vmatpush.xpose.msra.mxu0 0.0
    %516 = vmatpush.xpose.msra.mxu0 0.0
    %517 = vmatpush.xpose.msra.mxu0 %v479
    %518 = vmatpush.xpose.msra.mxu0 %v453
    %519 = vmatpush.xpose.msra.mxu0 %v427
    %520 = vmatpush.xpose.msra.mxu0 %v401
    %521 = vmatmul.f32.gmra.mxu0 %v178
    %v522 = vpop.f32.mrf.mxu0
    %v523 = vadd.f32 0.0, %v522
    %524 = vdwg.mxu0
    %525 = vmatpush.xpose.msra.mxu0 0.0
    %526 = vmatpush.xpose.msra.mxu0 0.0
    %527 = vmatpush.xpose.msra.mxu0 0.0
    %528 = vmatpush.xpose.msra.mxu0 0.0
    %529 = vmatpush.xpose.msra.mxu0 0.0
    %530 = vmatpush.xpose.msra.mxu0 0.0
    %531 = vmatpush.xpose.msra.mxu0 0.0
    %532 = vmatpush.xpose.msra.mxu0 0.0
    %533 = vmatpush.xpose.msra.mxu0 0.0
    %534 = vmatpush.xpose.msra.mxu0 0.0
    %535 = vmatpush.xpose.msra.mxu0 0.0
    %536 = vmatpush.xpose.msra.mxu0 0.0
    %537 = vmatpush.xpose.msra.mxu0 %v480
    %538 = vmatpush.xpose.msra.mxu0 %v454
    %539 = vmatpush.xpose.msra.mxu0 %v428
    %540 = vmatpush.xpose.msra.mxu0 %v402
    %541 = vmatmul.f32.gmra.mxu0 %v179
    %v542 = vpop.f32.mrf.mxu0
    %v543 = vadd.f32 %v523, %v542
    %544 = vdwg.mxu0
    %545 = vmatpush.xpose.msra.mxu0 0.0
    %546 = vmatpush.xpose.msra.mxu0 0.0
    %547 = vmatpush.xpose.msra.mxu0 0.0
    %548 = vmatpush.xpose.msra.mxu0 0.0
    %549 = vmatpush.xpose.msra.mxu0 0.0
    %550 = vmatpush.xpose.msra.mxu0 0.0
    %551 = vmatpush.xpose.msra.mxu0 0.0
    %552 = vmatpush.xpose.msra.mxu0 0.0
    %553 = vmatpush.xpose.msra.mxu0 0.0
    %554 = vmatpush.xpose.msra.mxu0 0.0
    %555 = vmatpush.xpose.msra.mxu0 0.0
    %556 = vmatpush.xpose.msra.mxu0 0.0
    %557 = vmatpush.xpose.msra.mxu0 %v481
    %558 = vmatpush.xpose.msra.mxu0 %v455
    %559 = vmatpush.xpose.msra.mxu0 %v429
    %560 = vmatpush.xpose.msra.mxu0 %v403
    %561 = vmatmul.f32.gmra.mxu0 %v180
    %v562 = vpop.f32.mrf.mxu0
    %v563 = vadd.f32 %v543, %v562
    %564 = vdwg.mxu0
    %565 = vmatpush.xpose.msra.mxu0 0.0
    %566 = vmatpush.xpose.msra.mxu0 0.0
    %567 = vmatpush.xpose.msra.mxu0 0.0
    %568 = vmatpush.xpose.msra.mxu0 0.0
    %569 = vmatpush.xpose.msra.mxu0 0.0
    %570 = vmatpush.xpose.msra.mxu0 0.0
    %571 = vmatpush.xpose.msra.mxu0 0.0
    %572 = vmatpush.xpose.msra.mxu0 0.0
    %573 = vmatpush.xpose.msra.mxu0 0.0
    %574 = vmatpush.xpose.msra.mxu0 0.0
    %575 = vmatpush.xpose.msra.mxu0 0.0
    %576 = vmatpush.xpose.msra.mxu0 0.0
    %577 = vmatpush.xpose.msra.mxu0 %v482
    %578 = vmatpush.xpose.msra.mxu0 %v456
    %579 = vmatpush.xpose.msra.mxu0 %v430
    %580 = vmatpush.xpose.msra.mxu0 %v404
    %581 = vmatmul.f32.gmra.mxu0 %v181
    %v582 = vpop.f32.mrf.mxu0
    %v583 = vadd.f32 %v563, %v582
    %584 = vdwg.mxu0
    %585 = vmatpush.xpose.msra.mxu0 0.0
    %586 = vmatpush.xpose.msra.mxu0 0.0
    %587 = vmatpush.xpose.msra.mxu0 0.0
    %588 = vmatpush.xpose.msra.mxu0 0.0
    %589 = vmatpush.xpose.msra.mxu0 0.0
    %590 = vmatpush.xpose.msra.mxu0 0.0
    %591 = vmatpush.xpose.msra.mxu0 0.0
    %592 = vmatpush.xpose.msra.mxu0 0.0
    %593 = vmatpush.xpose.msra.mxu0 0.0
    %594 = vmatpush.xpose.msra.mxu0 0.0
    %595 = vmatpush.xpose.msra.mxu0 0.0
    %596 = vmatpush.xpose.msra.mxu0 0.0
    %597 = vmatpush.xpose.msra.mxu0 %v483
    %598 = vmatpush.xpose.msra.mxu0 %v457
    %599 = vmatpush.xpose.msra.mxu0 %v431
    %600 = vmatpush.xpose.msra.mxu0 %v405
    %601 = vmatmul.f32.gmra.mxu0 %v182
    %v602 = vpop.f32.mrf.mxu0
    %v603 = vadd.f32 %v583, %v602
    %604 = vdwg.mxu0
    %605 = vmatpush.xpose.msra.mxu0 0.0
    %606 = vmatpush.xpose.msra.mxu0 0.0
    %607 = vmatpush.xpose.msra.mxu0 0.0
    %608 = vmatpush.xpose.msra.mxu0 0.0
    %609 = vmatpush.xpose.msra.mxu0 0.0
    %610 = vmatpush.xpose.msra.mxu0 0.0
    %611 = vmatpush.xpose.msra.mxu0 0.0
    %612 = vmatpush.xpose.msra.mxu0 0.0
    %613 = vmatpush.xpose.msra.mxu0 0.0
    %614 = vmatpush.xpose.msra.mxu0 0.0
    %615 = vmatpush.xpose.msra.mxu0 0.0
    %616 = vmatpush.xpose.msra.mxu0 0.0
    %617 = vmatpush.xpose.msra.mxu0 %v484
    %618 = vmatpush.xpose.msra.mxu0 %v458
    %619 = vmatpush.xpose.msra.mxu0 %v432
    %620 = vmatpush.xpose.msra.mxu0 %v406
    %621 = vmatmul.f32.gmra.mxu0 %v183
    %v622 = vpop.f32.mrf.mxu0
    %v623 = vadd.f32 %v603, %v622
    %624 = vdwg.mxu0
    %625 = vmatpush.xpose.msra.mxu0 0.0
    %626 = vmatpush.xpose.msra.mxu0 0.0
    %627 = vmatpush.xpose.msra.mxu0 0.0
    %628 = vmatpush.xpose.msra.mxu0 0.0
    %629 = vmatpush.xpose.msra.mxu0 0.0
    %630 = vmatpush.xpose.msra.mxu0 0.0
    %631 = vmatpush.xpose.msra.mxu0 0.0
    %632 = vmatpush.xpose.msra.mxu0 0.0
    %633 = vmatpush.xpose.msra.mxu0 0.0
    %634 = vmatpush.xpose.msra.mxu0 0.0
    %635 = vmatpush.xpose.msra.mxu0 0.0
    %636 = vmatpush.xpose.msra.mxu0 0.0
    %637 = vmatpush.xpose.msra.mxu0 %v485
    %638 = vmatpush.xpose.msra.mxu0 %v459
    %639 = vmatpush.xpose.msra.mxu0 %v433
    %640 = vmatpush.xpose.msra.mxu0 %v407
    %641 = vmatmul.f32.gmra.mxu0 %v184
    %v642 = vpop.f32.mrf.mxu0
    %v643 = vadd.f32 %v623, %v642
    %644 = vdwg.mxu0
    %645 = vmatpush.xpose.msra.mxu0 0.0
    %646 = vmatpush.xpose.msra.mxu0 0.0
    %647 = vmatpush.xpose.msra.mxu0 0.0
    %648 = vmatpush.xpose.msra.mxu0 0.0
    %649 = vmatpush.xpose.msra.mxu0 0.0
    %650 = vmatpush.xpose.msra.mxu0 0.0
    %651 = vmatpush.xpose.msra.mxu0 0.0
    %652 = vmatpush.xpose.msra.mxu0 0.0
    %653 = vmatpush.xpose.msra.mxu0 0.0
    %654 = vmatpush.xpose.msra.mxu0 0.0
    %655 = vmatpush.xpose.msra.mxu0 0.0
    %656 = vmatpush.xpose.msra.mxu0 0.0
    %657 = vmatpush.xpose.msra.mxu0 %v486
    %658 = vmatpush.xpose.msra.mxu0 %v460
    %659 = vmatpush.xpose.msra.mxu0 %v434
    %660 = vmatpush.xpose.msra.mxu0 %v408
    %661 = vmatmul.f32.gmra.mxu0 %v185
    %v662 = vpop.f32.mrf.mxu0
    %v663 = vadd.f32 %v643, %v662
    %664 = vdwg.mxu0
    %665 = vmatpush.xpose.msra.mxu0 0.0
    %666 = vmatpush.xpose.msra.mxu0 0.0
    %667 = vmatpush.xpose.msra.mxu0 0.0
    %668 = vmatpush.xpose.msra.mxu0 0.0
    %669 = vmatpush.xpose.msra.mxu0 0.0
    %670 = vmatpush.xpose.msra.mxu0 0.0
    %671 = vmatpush.xpose.msra.mxu0 0.0
    %672 = vmatpush.xpose.msra.mxu0 0.0
    %673 = vmatpush.xpose.msra.mxu0 0.0
    %674 = vmatpush.xpose.msra.mxu0 0.0
    %675 = vmatpush.xpose.msra.mxu0 0.0
    %676 = vmatpush.xpose.msra.mxu0 0.0
    %677 = vmatpush.xpose.msra.mxu0 %v487
    %678 = vmatpush.xpose.msra.mxu0 %v461
    %679 = vmatpush.xpose.msra.mxu0 %v435
    %680 = vmatpush.xpose.msra.mxu0 %v409
    %681 = vmatmul.f32.gmra.mxu0 %v186
    %v682 = vpop.f32.mrf.mxu0
    %v683 = vadd.f32 %v663, %v682
    %684 = vdwg.mxu0
    %685 = vmatpush.xpose.msra.mxu0 0.0
    %686 = vmatpush.xpose.msra.mxu0 0.0
    %687 = vmatpush.xpose.msra.mxu0 0.0
    %688 = vmatpush.xpose.msra.mxu0 0.0
    %689 = vmatpush.xpose.msra.mxu0 0.0
    %690 = vmatpush.xpose.msra.mxu0 0.0
    %691 = vmatpush.xpose.msra.mxu0 0.0
    %692 = vmatpush.xpose.msra.mxu0 0.0
    %693 = vmatpush.xpose.msra.mxu0 0.0
    %694 = vmatpush.xpose.msra.mxu0 0.0
    %695 = vmatpush.xpose.msra.mxu0 0.0
    %696 = vmatpush.xpose.msra.mxu0 0.0
    %697 = vmatpush.xpose.msra.mxu0 %v488
    %698 = vmatpush.xpose.msra.mxu0 %v462
    %699 = vmatpush.xpose.msra.mxu0 %v436
    %700 = vmatpush.xpose.msra.mxu0 %v410
    %701 = vmatmul.f32.gmra.mxu0 %v187
    %v702 = vpop.f32.mrf.mxu0
    %v703 = vadd.f32 %v683, %v702
    %704 = vdwg.mxu0
    %705 = vmatpush.xpose.msra.mxu0 0.0
    %706 = vmatpush.xpose.msra.mxu0 0.0
    %707 = vmatpush.xpose.msra.mxu0 0.0
    %708 = vmatpush.xpose.msra.mxu0 0.0
    %709 = vmatpush.xpose.msra.mxu0 0.0
    %710 = vmatpush.xpose.msra.mxu0 0.0
    %711 = vmatpush.xpose.msra.mxu0 0.0
    %712 = vmatpush.xpose.msra.mxu0 0.0
    %713 = vmatpush.xpose.msra.mxu0 0.0
    %714 = vmatpush.xpose.msra.mxu0 0.0
    %715 = vmatpush.xpose.msra.mxu0 0.0
    %716 = vmatpush.xpose.msra.mxu0 0.0
    %717 = vmatpush.xpose.msra.mxu0 %v489
    %718 = vmatpush.xpose.msra.mxu0 %v463
    %719 = vmatpush.xpose.msra.mxu0 %v437
    %720 = vmatpush.xpose.msra.mxu0 %v411
    %721 = vmatmul.f32.gmra.mxu0 %v188
    %v722 = vpop.f32.mrf.mxu0
    %v723 = vadd.f32 %v703, %v722
    %724 = vdwg.mxu0
    %725 = vmatpush.xpose.msra.mxu0 0.0
    %726 = vmatpush.xpose.msra.mxu0 0.0
    %727 = vmatpush.xpose.msra.mxu0 0.0
    %728 = vmatpush.xpose.msra.mxu0 0.0
    %729 = vmatpush.xpose.msra.mxu0 0.0
    %730 = vmatpush.xpose.msra.mxu0 0.0
    %731 = vmatpush.xpose.msra.mxu0 0.0
    %732 = vmatpush.xpose.msra.mxu0 0.0
    %733 = vmatpush.xpose.msra.mxu0 0.0
    %734 = vmatpush.xpose.msra.mxu0 0.0
    %735 = vmatpush.xpose.msra.mxu0 0.0
    %736 = vmatpush.xpose.msra.mxu0 0.0
    %737 = vmatpush.xpose.msra.mxu0 %v490
    %738 = vmatpush.xpose.msra.mxu0 %v464
    %739 = vmatpush.xpose.msra.mxu0 %v438
    %740 = vmatpush.xpose.msra.mxu0 %v412
    %741 = vmatmul.f32.gmra.mxu0 %v189
    %v742 = vpop.f32.mrf.mxu0
    %v743 = vadd.f32 %v723, %v742
    %744 = vdwg.mxu0
    %745 = vmatpush.xpose.msra.mxu0 0.0
    %746 = vmatpush.xpose.msra.mxu0 0.0
    %747 = vmatpush.xpose.msra.mxu0 0.0
    %748 = vmatpush.xpose.msra.mxu0 0.0
    %749 = vmatpush.xpose.msra.mxu0 0.0
    %750 = vmatpush.xpose.msra.mxu0 0.0
    %751 = vmatpush.xpose.msra.mxu0 0.0
    %752 = vmatpush.xpose.msra.mxu0 0.0
    %753 = vmatpush.xpose.msra.mxu0 0.0
    %754 = vmatpush.xpose.msra.mxu0 0.0
    %755 = vmatpush.xpose.msra.mxu0 0.0
    %756 = vmatpush.xpose.msra.mxu0 0.0
    %757 = vmatpush.xpose.msra.mxu0 %v491
    %758 = vmatpush.xpose.msra.mxu0 %v465
    %759 = vmatpush.xpose.msra.mxu0 %v439
    %760 = vmatpush.xpose.msra.mxu0 %v413
    %761 = vmatmul.f32.gmra.mxu0 %v190
    %v762 = vpop.f32.mrf.mxu0
    %v763 = vadd.f32 %v743, %v762
    %764 = vdwg.mxu0
    %765 = vmatpush.xpose.msra.mxu0 0.0
    %766 = vmatpush.xpose.msra.mxu0 0.0
    %767 = vmatpush.xpose.msra.mxu0 0.0
    %768 = vmatpush.xpose.msra.mxu0 0.0
    %769 = vmatpush.xpose.msra.mxu0 0.0
    %770 = vmatpush.xpose.msra.mxu0 0.0
    %771 = vmatpush.xpose.msra.mxu0 0.0
    %772 = vmatpush.xpose.msra.mxu0 0.0
    %773 = vmatpush.xpose.msra.mxu0 0.0
    %774 = vmatpush.xpose.msra.mxu0 0.0
    %775 = vmatpush.xpose.msra.mxu0 0.0
    %776 = vmatpush.xpose.msra.mxu0 0.0
    %777 = vmatpush.xpose.msra.mxu0 %v492
    %778 = vmatpush.xpose.msra.mxu0 %v466
    %779 = vmatpush.xpose.msra.mxu0 %v440
    %780 = vmatpush.xpose.msra.mxu0 %v414
    %781 = vmatmul.f32.gmra.mxu0 %v191
    %v782 = vpop.f32.mrf.mxu0
    %v783 = vadd.f32 %v763, %v782
    %784 = vdwg.mxu0
    %785 = vmatpush.xpose.msra.mxu0 0.0
    %786 = vmatpush.xpose.msra.mxu0 0.0
    %787 = vmatpush.xpose.msra.mxu0 0.0
    %788 = vmatpush.xpose.msra.mxu0 0.0
    %789 = vmatpush.xpose.msra.mxu0 0.0
    %790 = vmatpush.xpose.msra.mxu0 0.0
    %791 = vmatpush.xpose.msra.mxu0 0.0
    %792 = vmatpush.xpose.msra.mxu0 0.0
    %793 = vmatpush.xpose.msra.mxu0 0.0
    %794 = vmatpush.xpose.msra.mxu0 0.0
    %795 = vmatpush.xpose.msra.mxu0 0.0
    %796 = vmatpush.xpose.msra.mxu0 0.0
    %797 = vmatpush.xpose.msra.mxu0 %v493
    %798 = vmatpush.xpose.msra.mxu0 %v467
    %799 = vmatpush.xpose.msra.mxu0 %v441
    %800 = vmatpush.xpose.msra.mxu0 %v415
    %801 = vmatmul.f32.gmra.mxu0 %v192
    %v802 = vpop.f32.mrf.mxu0
    %v803 = vadd.f32 %v783, %v802
    %804 = vdwg.mxu0
    %805 = vmatpush.xpose.msra.mxu0 0.0
    %806 = vmatpush.xpose.msra.mxu0 0.0
    %807 = vmatpush.xpose.msra.mxu0 0.0
    %808 = vmatpush.xpose.msra.mxu0 0.0
    %809 = vmatpush.xpose.msra.mxu0 0.0
    %810 = vmatpush.xpose.msra.mxu0 0.0
    %811 = vmatpush.xpose.msra.mxu0 0.0
    %812 = vmatpush.xpose.msra.mxu0 0.0
    %813 = vmatpush.xpose.msra.mxu0 0.0
    %814 = vmatpush.xpose.msra.mxu0 0.0
    %815 = vmatpush.xpose.msra.mxu0 0.0
    %816 = vmatpush.xpose.msra.mxu0 0.0
    %817 = vmatpush.xpose.msra.mxu0 %v494
    %818 = vmatpush.xpose.msra.mxu0 %v468
    %819 = vmatpush.xpose.msra.mxu0 %v442
    %820 = vmatpush.xpose.msra.mxu0 %v416
    %821 = vmatmul.f32.gmra.mxu0 %v193
    %v822 = vpop.f32.mrf.mxu0
    %v823 = vadd.f32 %v803, %v822
    %824 = vdwg.mxu0
    %825 = vmatpush.xpose.msra.mxu0 0.0
    %826 = vmatpush.xpose.msra.mxu0 0.0
    %827 = vmatpush.xpose.msra.mxu0 0.0
    %828 = vmatpush.xpose.msra.mxu0 0.0
    %829 = vmatpush.xpose.msra.mxu0 0.0
    %830 = vmatpush.xpose.msra.mxu0 0.0
    %831 = vmatpush.xpose.msra.mxu0 0.0
    %832 = vmatpush.xpose.msra.mxu0 0.0
    %833 = vmatpush.xpose.msra.mxu0 0.0
    %834 = vmatpush.xpose.msra.mxu0 0.0
    %835 = vmatpush.xpose.msra.mxu0 0.0
    %836 = vmatpush.xpose.msra.mxu0 0.0
    %837 = vmatpush.xpose.msra.mxu0 %v495
    %838 = vmatpush.xpose.msra.mxu0 %v469
    %839 = vmatpush.xpose.msra.mxu0 %v443
    %840 = vmatpush.xpose.msra.mxu0 %v417
    %841 = vmatmul.f32.gmra.mxu0 %v194
    %v842 = vpop.f32.mrf.mxu0
    %v843 = vadd.f32 %v823, %v842
    %844 = vdwg.mxu0
    %845 = vmatpush.xpose.msra.mxu0 0.0
    %846 = vmatpush.xpose.msra.mxu0 0.0
    %847 = vmatpush.xpose.msra.mxu0 0.0
    %848 = vmatpush.xpose.msra.mxu0 0.0
    %849 = vmatpush.xpose.msra.mxu0 0.0
    %850 = vmatpush.xpose.msra.mxu0 0.0
    %851 = vmatpush.xpose.msra.mxu0 0.0
    %852 = vmatpush.xpose.msra.mxu0 0.0
    %853 = vmatpush.xpose.msra.mxu0 0.0
    %854 = vmatpush.xpose.msra.mxu0 0.0
    %855 = vmatpush.xpose.msra.mxu0 0.0
    %856 = vmatpush.xpose.msra.mxu0 0.0
    %857 = vmatpush.xpose.msra.mxu0 %v496
    %858 = vmatpush.xpose.msra.mxu0 %v470
    %859 = vmatpush.xpose.msra.mxu0 %v444
    %860 = vmatpush.xpose.msra.mxu0 %v418
    %861 = vmatmul.f32.gmra.mxu0 %v195
    %v862 = vpop.f32.mrf.mxu0
    %v863 = vadd.f32 %v843, %v862
    %864 = vdwg.mxu0
    %865 = vmatpush.xpose.msra.mxu0 0.0
    %866 = vmatpush.xpose.msra.mxu0 0.0
    %867 = vmatpush.xpose.msra.mxu0 0.0
    %868 = vmatpush.xpose.msra.mxu0 0.0
    %869 = vmatpush.xpose.msra.mxu0 0.0
    %870 = vmatpush.xpose.msra.mxu0 0.0
    %871 = vmatpush.xpose.msra.mxu0 0.0
    %872 = vmatpush.xpose.msra.mxu0 0.0
    %873 = vmatpush.xpose.msra.mxu0 0.0
    %874 = vmatpush.xpose.msra.mxu0 0.0
    %875 = vmatpush.xpose.msra.mxu0 0.0
    %876 = vmatpush.xpose.msra.mxu0 0.0
    %877 = vmatpush.xpose.msra.mxu0 %v497
    %878 = vmatpush.xpose.msra.mxu0 %v471
    %879 = vmatpush.xpose.msra.mxu0 %v445
    %880 = vmatpush.xpose.msra.mxu0 %v419
    %881 = vmatmul.f32.gmra.mxu0 %v196
    %v882 = vpop.f32.mrf.mxu0
    %v883 = vadd.f32 %v863, %v882
    %884 = vdwg.mxu0
    %885 = vmatpush.xpose.msra.mxu0 0.0
    %886 = vmatpush.xpose.msra.mxu0 0.0
    %887 = vmatpush.xpose.msra.mxu0 0.0
    %888 = vmatpush.xpose.msra.mxu0 0.0
    %889 = vmatpush.xpose.msra.mxu0 0.0
    %890 = vmatpush.xpose.msra.mxu0 0.0
    %891 = vmatpush.xpose.msra.mxu0 0.0
    %892 = vmatpush.xpose.msra.mxu0 0.0
    %893 = vmatpush.xpose.msra.mxu0 0.0
    %894 = vmatpush.xpose.msra.mxu0 0.0
    %895 = vmatpush.xpose.msra.mxu0 0.0
    %896 = vmatpush.xpose.msra.mxu0 0.0
    %897 = vmatpush.xpose.msra.mxu0 %v498
    %898 = vmatpush.xpose.msra.mxu0 %v472
    %899 = vmatpush.xpose.msra.mxu0 %v446
    %900 = vmatpush.xpose.msra.mxu0 %v420
    %901 = vmatmul.f32.gmra.mxu0 %v197
    %v902 = vpop.f32.mrf.mxu0
    %v903 = vadd.f32 %v883, %v902
    %904 = vdwg.mxu0
    %905 = vmatpush.xpose.msra.mxu0 0.0
    %906 = vmatpush.xpose.msra.mxu0 0.0
    %907 = vmatpush.xpose.msra.mxu0 0.0
    %908 = vmatpush.xpose.msra.mxu0 0.0
    %909 = vmatpush.xpose.msra.mxu0 0.0
    %910 = vmatpush.xpose.msra.mxu0 0.0
    %911 = vmatpush.xpose.msra.mxu0 0.0
    %912 = vmatpush.xpose.msra.mxu0 0.0
    %913 = vmatpush.xpose.msra.mxu0 0.0
    %914 = vmatpush.xpose.msra.mxu0 0.0
    %915 = vmatpush.xpose.msra.mxu0 0.0
    %916 = vmatpush.xpose.msra.mxu0 0.0
    %917 = vmatpush.xpose.msra.mxu0 %v499
    %918 = vmatpush.xpose.msra.mxu0 %v473
    %919 = vmatpush.xpose.msra.mxu0 %v447
    %920 = vmatpush.xpose.msra.mxu0 %v421
    %921 = vmatmul.f32.gmra.mxu0 %v198
    %v922 = vpop.f32.mrf.mxu0
    %v923 = vadd.f32 %v903, %v922
    %924 = vdwg.mxu0
    %925 = vmatpush.xpose.msra.mxu0 0.0
    %926 = vmatpush.xpose.msra.mxu0 0.0
    %927 = vmatpush.xpose.msra.mxu0 0.0
    %928 = vmatpush.xpose.msra.mxu0 0.0
    %929 = vmatpush.xpose.msra.mxu0 0.0
    %930 = vmatpush.xpose.msra.mxu0 0.0
    %931 = vmatpush.xpose.msra.mxu0 0.0
    %932 = vmatpush.xpose.msra.mxu0 0.0
    %933 = vmatpush.xpose.msra.mxu0 0.0
    %934 = vmatpush.xpose.msra.mxu0 0.0
    %935 = vmatpush.xpose.msra.mxu0 0.0
    %936 = vmatpush.xpose.msra.mxu0 0.0
    %937 = vmatpush.xpose.msra.mxu0 %v500
    %938 = vmatpush.xpose.msra.mxu0 %v474
    %939 = vmatpush.xpose.msra.mxu0 %v448
    %940 = vmatpush.xpose.msra.mxu0 %v422
    %941 = vmatmul.f32.gmra.mxu0 %v199
    %v942 = vpop.f32.mrf.mxu0
    %v943 = vadd.f32 %v923, %v942
    %944 = vdwg.mxu0
    %945 = vmatpush.xpose.msra.mxu0 0.0
    %946 = vmatpush.xpose.msra.mxu0 0.0
    %947 = vmatpush.xpose.msra.mxu0 0.0
    %948 = vmatpush.xpose.msra.mxu0 0.0
    %949 = vmatpush.xpose.msra.mxu0 0.0
    %950 = vmatpush.xpose.msra.mxu0 0.0
    %951 = vmatpush.xpose.msra.mxu0 0.0
    %952 = vmatpush.xpose.msra.mxu0 0.0
    %953 = vmatpush.xpose.msra.mxu0 0.0
    %954 = vmatpush.xpose.msra.mxu0 0.0
    %955 = vmatpush.xpose.msra.mxu0 0.0
    %956 = vmatpush.xpose.msra.mxu0 0.0
    %957 = vmatpush.xpose.msra.mxu0 %v501
    %958 = vmatpush.xpose.msra.mxu0 %v475
    %959 = vmatpush.xpose.msra.mxu0 %v449
    %960 = vmatpush.xpose.msra.mxu0 %v423
    %961 = vmatmul.f32.gmra.mxu0 %v200
    %v962 = vpop.f32.mrf.mxu0
    %v963 = vadd.f32 %v943, %v962
    %964 = vdwg.mxu0
    %965 = vmatpush.xpose.msra.mxu0 0.0
    %966 = vmatpush.xpose.msra.mxu0 0.0
    %967 = vmatpush.xpose.msra.mxu0 0.0
    %968 = vmatpush.xpose.msra.mxu0 0.0
    %969 = vmatpush.xpose.msra.mxu0 0.0
    %970 = vmatpush.xpose.msra.mxu0 0.0
    %971 = vmatpush.xpose.msra.mxu0 0.0
    %972 = vmatpush.xpose.msra.mxu0 0.0
    %973 = vmatpush.xpose.msra.mxu0 0.0
    %974 = vmatpush.xpose.msra.mxu0 0.0
    %975 = vmatpush.xpose.msra.mxu0 0.0
    %976 = vmatpush.xpose.msra.mxu0 0.0
    %977 = vmatpush.xpose.msra.mxu0 %v502
    %978 = vmatpush.xpose.msra.mxu0 %v476
    %979 = vmatpush.xpose.msra.mxu0 %v450
    %980 = vmatpush.xpose.msra.mxu0 %v424
    %981 = vmatmul.f32.gmra.mxu0 %v201
    %v982 = vpop.f32.mrf.mxu0
    %v983 = vadd.f32 %v963, %v982
    %984 = vdwg.mxu0
    %985 = vmatpush.xpose.msra.mxu0 0.0
    %986 = vmatpush.xpose.msra.mxu0 0.0
    %987 = vmatpush.xpose.msra.mxu0 0.0
    %988 = vmatpush.xpose.msra.mxu0 0.0
    %989 = vmatpush.xpose.msra.mxu0 0.0
    %990 = vmatpush.xpose.msra.mxu0 0.0
    %991 = vmatpush.xpose.msra.mxu0 0.0
    %992 = vmatpush.xpose.msra.mxu0 0.0
    %993 = vmatpush.xpose.msra.mxu0 0.0
    %994 = vmatpush.xpose.msra.mxu0 0.0
    %995 = vmatpush.xpose.msra.mxu0 0.0
    %996 = vmatpush.xpose.msra.mxu0 0.0
    %997 = vmatpush.xpose.msra.mxu0 %v503
    %998 = vmatpush.xpose.msra.mxu0 %v477
    %999 = vmatpush.xpose.msra.mxu0 %v451
    %1000 = vmatpush.xpose.msra.mxu0 %v425
    %1001 = vmatmul.f32.gmra.mxu0 %v202
    %v1002 = vpop.f32.mrf.mxu0
    %v1003 = vadd.f32 %v983, %v1002
    %1004 = vdwg.mxu0
    %1005 = vmatpush.xpose.msra.mxu0 0.0
    %1006 = vmatpush.xpose.msra.mxu0 0.0
    %1007 = vmatpush.xpose.msra.mxu0 0.0
    %1008 = vmatpush.xpose.msra.mxu0 0.0
    %1009 = vmatpush.xpose.msra.mxu0 0.0
    %1010 = vmatpush.xpose.msra.mxu0 0.0
    %1011 = vmatpush.xpose.msra.mxu0 0.0
    %1012 = vmatpush.xpose.msra.mxu0 0.0
    %1013 = vmatpush.xpose.msra.mxu0 0.0
    %1014 = vmatpush.xpose.msra.mxu0 0.0
    %1015 = vmatpush.xpose.msra.mxu0 0.0
    %1016 = vmatpush.xpose.msra.mxu0 0.0
    %1017 = vmatpush.xpose.msra.mxu0 %v504
    %1018 = vmatpush.xpose.msra.mxu0 %v478
    %1019 = vmatpush.xpose.msra.mxu0 %v452
    %1020 = vmatpush.xpose.msra.mxu0 %v426
    %1021 = vmatmul.f32.gmra.mxu0 %v203
    %v1022 = vpop.f32.mrf.mxu0
    %v1023 = vadd.f32 %v1003, %v1022
    %1024 = vdwg.mxu0
    %v1025 = vld [vmem:[#allocation11] sm:$0xff]
    %v1026 = vld [vmem:[#allocation11 + $0x8] sm:$0xff]
    %v1027 = vld [vmem:[#allocation11 + $0x10] sm:$0xff]
    %v1028 = vld [vmem:[#allocation11 + $0x18] sm:$0xff]
    %v1029 = vld [vmem:[#allocation11 + $0x20] sm:$0xff]
    %v1030 = vld [vmem:[#allocation11 + $0x28] sm:$0xff]
    %v1031 = vld [vmem:[#allocation11 + $0x30] sm:$0xff]
    %v1032 = vld [vmem:[#allocation11 + $0x38] sm:$0xff]
    %v1033 = vld [vmem:[#allocation11 + $0x40] sm:$0xff]
    %v1034 = vld [vmem:[#allocation11 + $0x48] sm:$0xff]
    %v1035 = vld [vmem:[#allocation11 + $0x50] sm:$0xff]
    %v1036 = vld [vmem:[#allocation11 + $0x58] sm:$0xff]
    %1037 = vmatpush.xpose.msra.mxu0 0.0
    %1038 = vmatpush.xpose.msra.mxu0 0.0
    %1039 = vmatpush.xpose.msra.mxu0 0.0
    %1040 = vmatpush.xpose.msra.mxu0 0.0
    %1041 = vmatpush.xpose.msra.mxu0 0.0
    %1042 = vmatpush.xpose.msra.mxu0 0.0
    %1043 = vmatpush.xpose.msra.mxu0 0.0
    %1044 = vmatpush.xpose.msra.mxu0 0.0
    %1045 = vmatpush.xpose.msra.mxu0 0.0
    %1046 = vmatpush.xpose.msra.mxu0 0.0
    %1047 = vmatpush.xpose.msra.mxu0 0.0
    %1048 = vmatpush.xpose.msra.mxu0 0.0
    %1049 = vmatpush.xpose.msra.mxu0 %v1034
    %1050 = vmatpush.xpose.msra.mxu0 %v1031
    %1051 = vmatpush.xpose.msra.mxu0 %v1028
    %1052 = vmatpush.xpose.msra.mxu0 %v1025
    %1053 = vmatmul.f32.gmra.mxu0 %v206
    %v1054 = vpop.f32.mrf.mxu0
    %v1055 = vadd.f32 0.0, %v1054
    %1056 = vdwg.mxu0
    %1057 = vmatpush.xpose.msra.mxu0 0.0
    %1058 = vmatpush.xpose.msra.mxu0 0.0
    %1059 = vmatpush.xpose.msra.mxu0 0.0
    %1060 = vmatpush.xpose.msra.mxu0 0.0
    %1061 = vmatpush.xpose.msra.mxu0 0.0
    %1062 = vmatpush.xpose.msra.mxu0 0.0
    %1063 = vmatpush.xpose.msra.mxu0 0.0
    %1064 = vmatpush.xpose.msra.mxu0 0.0
    %1065 = vmatpush.xpose.msra.mxu0 0.0
    %1066 = vmatpush.xpose.msra.mxu0 0.0
    %1067 = vmatpush.xpose.msra.mxu0 0.0
    %1068 = vmatpush.xpose.msra.mxu0 0.0
    %1069 = vmatpush.xpose.msra.mxu0 %v1035
    %1070 = vmatpush.xpose.msra.mxu0 %v1032
    %1071 = vmatpush.xpose.msra.mxu0 %v1029
    %1072 = vmatpush.xpose.msra.mxu0 %v1026
    %1073 = vmatmul.f32.gmra.mxu0 %v207
    %v1074 = vpop.f32.mrf.mxu0
    %v1075 = vadd.f32 %v1055, %v1074
    %1076 = vdwg.mxu0
    %1077 = vmatpush.xpose.msra.mxu0 0.0
    %1078 = vmatpush.xpose.msra.mxu0 0.0
    %1079 = vmatpush.xpose.msra.mxu0 0.0
    %1080 = vmatpush.xpose.msra.mxu0 0.0
    %1081 = vmatpush.xpose.msra.mxu0 0.0
    %1082 = vmatpush.xpose.msra.mxu0 0.0
    %1083 = vmatpush.xpose.msra.mxu0 0.0
    %1084 = vmatpush.xpose.msra.mxu0 0.0
    %1085 = vmatpush.xpose.msra.mxu0 0.0
    %1086 = vmatpush.xpose.msra.mxu0 0.0
    %1087 = vmatpush.xpose.msra.mxu0 0.0
    %1088 = vmatpush.xpose.msra.mxu0 0.0
    %1089 = vmatpush.xpose.msra.mxu0 %v1036
    %1090 = vmatpush.xpose.msra.mxu0 %v1033
    %1091 = vmatpush.xpose.msra.mxu0 %v1030
    %1092 = vmatpush.xpose.msra.mxu0 %v1027
    %1093 = vmatmul.f32.gmra.mxu0 %v208
    %v1094 = vpop.f32.mrf.mxu0
    %v1095 = vadd.f32 %v1075, %v1094
    %1096 = vdwg.mxu0
    %v1097 = vld [vmem:[%s6] sm:$0x1]
    %v1098 = vadd.f32 %v399, %v1023
    %v1099 = vadd.f32 %v1098, %v1095
    %v1101 = vperm.slane %v1097, 0
    %v1103 = vadd.f32 %v1099, %v1101
    %v1104 = vmax.f32 %v1103, 0.0
    %v1105 = vadd.f32 %v399, %v1101
    %v1106 = vmax.f32 %v1105, 0.0
    %v1107 = vadd.f32 %v1023, %v1101
    %v1108 = vmax.f32 %v1107, 0.0
    %v1109 = vadd.f32 %v1095, %v1101
    %v1110 = vmax.f32 %v1109, 0.0
    %vm1111 = vcmask 261120
    %1112 = vst.msk [vmem:[#allocation16] sm:$0xff] %vm1111, %v1104
    %1113 = vst.msk [vmem:[#allocation16 + $0x8] sm:$0xff] %vm1111, %v1106
    %1114 = vst.msk [vmem:[#allocation16 + $0x10] sm:$0xff] %vm1111, %v1108
    %1115 = vst.msk [vmem:[#allocation16 + $0x18] sm:$0xff] %vm1111, %v1110
    %v1116 = vld [vmem:[#allocation13] sm:$0xff]
    %v1117 = vld [vmem:[#allocation13 + $0x8] sm:$0xff]
    %v1118 = vld [vmem:[#allocation13 + $0x10] sm:$0xff]
    %v1119 = vld [vmem:[#allocation13 + $0x18] sm:$0xff]
    %v1120 = vld [vmem:[#allocation13 + $0x20] sm:$0xff]
    %v1121 = vld [vmem:[#allocation13 + $0x28] sm:$0xff]
    %v1122 = vld [vmem:[#allocation13 + $0x30] sm:$0xff]
    %v1123 = vld [vmem:[#allocation13 + $0x38] sm:$0xff]
    %v1124 = vld [vmem:[#allocation13 + $0x40] sm:$0xff]
    %v1125 = vld [vmem:[#allocation13 + $0x48] sm:$0xff]
    %v1126 = vld [vmem:[#allocation13 + $0x50] sm:$0xff]
    %v1127 = vld [vmem:[#allocation13 + $0x58] sm:$0xff]
    %v1128 = vld [vmem:[#allocation13 + $0x60] sm:$0xff]
    %v1129 = vld [vmem:[#allocation13 + $0x68] sm:$0xff]
    %v1130 = vld [vmem:[#allocation13 + $0x70] sm:$0xff]
    %v1131 = vld [vmem:[#allocation13 + $0x78] sm:$0xff]
    %v1132 = vld [vmem:[#allocation13 + $0x80] sm:$0xff]
    %v1133 = vld [vmem:[#allocation13 + $0x88] sm:$0xff]
    %v1134 = vld [vmem:[#allocation13 + $0x90] sm:$0xff]
    %v1135 = vld [vmem:[#allocation13 + $0x98] sm:$0xff]
    %v1136 = vld [vmem:[#allocation13 + $0xa0] sm:$0xff]
    %v1137 = vld [vmem:[#allocation13 + $0xa8] sm:$0xff]
    %v1138 = vld [vmem:[#allocation13 + $0xb0] sm:$0xff]
    %v1139 = vld [vmem:[#allocation13 + $0xb8] sm:$0xff]
    %v1140 = vld [vmem:[#allocation13 + $0xc0] sm:$0xff]
    %v1141 = vld [vmem:[#allocation13 + $0xc8] sm:$0xff]
    %v1142 = vld [vmem:[#allocation13 + $0xd0] sm:$0xff]
    %v1143 = vld [vmem:[#allocation13 + $0xd8] sm:$0xff]
    %v1144 = vld [vmem:[#allocation13 + $0xe0] sm:$0xff]
    %v1145 = vld [vmem:[#allocation13 + $0xe8] sm:$0xff]
    %v1146 = vld [vmem:[#allocation13 + $0xf0] sm:$0xff]
    %v1147 = vld [vmem:[#allocation13 + $0xf8] sm:$0xff]
    %v1148 = vld [vmem:[#allocation13 + $0x100] sm:$0xff]
    %v1149 = vld [vmem:[#allocation13 + $0x108] sm:$0xff]
    %v1150 = vld [vmem:[#allocation13 + $0x110] sm:$0xff]
    %v1151 = vld [vmem:[#allocation13 + $0x118] sm:$0xff]
    %v1152 = vld [vmem:[#allocation13 + $0x120] sm:$0xff]
    %v1153 = vld [vmem:[#allocation13 + $0x128] sm:$0xff]
    %v1154 = vld [vmem:[#allocation13 + $0x130] sm:$0xff]
    %v1155 = vld [vmem:[#allocation13 + $0x138] sm:$0xff]
    %v1156 = vld [vmem:[#allocation13 + $0x140] sm:$0xff]
    %v1157 = vld [vmem:[#allocation13 + $0x148] sm:$0xff]
    %v1158 = vld [vmem:[#allocation13 + $0x150] sm:$0xff]
    %v1159 = vld [vmem:[#allocation13 + $0x158] sm:$0xff]
    %v1160 = vld [vmem:[#allocation13 + $0x160] sm:$0xff]
    %v1161 = vld [vmem:[#allocation13 + $0x168] sm:$0xff]
    %v1162 = vld [vmem:[#allocation13 + $0x170] sm:$0xff]
    %v1163 = vld [vmem:[#allocation13 + $0x178] sm:$0xff]
    %v1164 = vld [vmem:[#allocation13 + $0x180] sm:$0xff]
    %v1165 = vld [vmem:[#allocation13 + $0x188] sm:$0xff]
    %v1166 = vld [vmem:[#allocation13 + $0x190] sm:$0xff]
    %v1167 = vld [vmem:[#allocation13 + $0x198] sm:$0xff]
    %v1168 = vld [vmem:[#allocation13 + $0x1a0] sm:$0xff]
    %v1169 = vld [vmem:[#allocation13 + $0x1a8] sm:$0xff]
    %v1170 = vld [vmem:[#allocation13 + $0x1b0] sm:$0xff]
    %v1171 = vld [vmem:[#allocation13 + $0x1b8] sm:$0xff]
    %v1172 = vld [vmem:[#allocation13 + $0x1c0] sm:$0xff]
    %v1173 = vld [vmem:[#allocation13 + $0x1c8] sm:$0xff]
    %v1174 = vld [vmem:[#allocation13 + $0x1d0] sm:$0xff]
    %v1175 = vld [vmem:[#allocation13 + $0x1d8] sm:$0xff]
    %v1176 = vld [vmem:[#allocation13 + $0x1e0] sm:$0xff]
    %v1177 = vld [vmem:[#allocation13 + $0x1e8] sm:$0xff]
    %v1178 = vld [vmem:[#allocation13 + $0x1f0] sm:$0xff]
    %v1179 = vld [vmem:[#allocation13 + $0x1f8] sm:$0xff]
    %v1180 = vld [vmem:[#allocation13 + $0x200] sm:$0xff]
    %v1181 = vld [vmem:[#allocation13 + $0x208] sm:$0xff]
    %v1182 = vld [vmem:[#allocation13 + $0x210] sm:$0xff]
    %v1183 = vld [vmem:[#allocation13 + $0x218] sm:$0xff]
    %v1184 = vld [vmem:[#allocation13 + $0x220] sm:$0xff]
    %v1185 = vld [vmem:[#allocation13 + $0x228] sm:$0xff]
    %v1186 = vld [vmem:[#allocation13 + $0x230] sm:$0xff]
    %v1187 = vld [vmem:[#allocation13 + $0x238] sm:$0xff]
    %v1188 = vld [vmem:[#allocation13 + $0x240] sm:$0xff]
    %v1189 = vld [vmem:[#allocation13 + $0x248] sm:$0xff]
    %v1190 = vld [vmem:[#allocation13 + $0x250] sm:$0xff]
    %v1191 = vld [vmem:[#allocation13 + $0x258] sm:$0xff]
    %v1192 = vld [vmem:[#allocation13 + $0x260] sm:$0xff]
    %v1193 = vld [vmem:[#allocation13 + $0x268] sm:$0xff]
    %v1194 = vld [vmem:[#allocation13 + $0x270] sm:$0xff]
    %v1195 = vld [vmem:[#allocation13 + $0x278] sm:$0xff]
    %v1196 = vld [vmem:[#allocation13 + $0x280] sm:$0xff]
    %v1197 = vld [vmem:[#allocation13 + $0x288] sm:$0xff]
    %v1198 = vld [vmem:[#allocation13 + $0x290] sm:$0xff]
    %v1199 = vld [vmem:[#allocation13 + $0x298] sm:$0xff]
    %v1200 = vld [vmem:[#allocation13 + $0x2a0] sm:$0xff]
    %v1201 = vld [vmem:[#allocation13 + $0x2a8] sm:$0xff]
    %v1202 = vld [vmem:[#allocation13 + $0x2b0] sm:$0xff]
    %v1203 = vld [vmem:[#allocation13 + $0x2b8] sm:$0xff]
    %v1204 = vld [vmem:[#allocation13 + $0x2c0] sm:$0xff]
    %v1205 = vld [vmem:[#allocation13 + $0x2c8] sm:$0xff]
    %v1206 = vld [vmem:[#allocation13 + $0x2d0] sm:$0xff]
    %v1207 = vld [vmem:[#allocation13 + $0x2d8] sm:$0xff]
    %v1208 = vld [vmem:[#allocation13 + $0x2e0] sm:$0xff]
    %v1209 = vld [vmem:[#allocation13 + $0x2e8] sm:$0xff]
    %v1210 = vld [vmem:[#allocation13 + $0x2f0] sm:$0xff]
    %v1211 = vld [vmem:[#allocation13 + $0x2f8] sm:$0xff]
    %v1212 = vld [vmem:[#allocation13 + $0x300] sm:$0xff]
    %v1213 = vld [vmem:[#allocation13 + $0x308] sm:$0xff]
    %v1214 = vld [vmem:[#allocation13 + $0x310] sm:$0xff]
    %v1215 = vld [vmem:[#allocation13 + $0x318] sm:$0xff]
    %v1216 = vld [vmem:[#allocation13 + $0x320] sm:$0xff]
    %v1217 = vld [vmem:[#allocation13 + $0x328] sm:$0xff]
    %v1218 = vld [vmem:[#allocation13 + $0x330] sm:$0xff]
    %v1219 = vld [vmem:[#allocation13 + $0x338] sm:$0xff]
    %v1220 = vld [vmem:[#allocation13 + $0x340] sm:$0xff]
    %v1221 = vld [vmem:[#allocation13 + $0x348] sm:$0xff]
    %v1222 = vld [vmem:[#allocation13 + $0x350] sm:$0xff]
    %v1223 = vld [vmem:[#allocation13 + $0x358] sm:$0xff]
    %v1224 = vld [vmem:[#allocation13 + $0x360] sm:$0xff]
    %v1225 = vld [vmem:[#allocation13 + $0x368] sm:$0xff]
    %v1226 = vld [vmem:[#allocation13 + $0x370] sm:$0xff]
    %v1227 = vld [vmem:[#allocation13 + $0x378] sm:$0xff]
    %v1228 = vld [vmem:[#allocation13 + $0x380] sm:$0xff]
    %v1229 = vld [vmem:[#allocation13 + $0x388] sm:$0xff]
    %v1230 = vld [vmem:[#allocation13 + $0x390] sm:$0xff]
    %v1231 = vld [vmem:[#allocation13 + $0x398] sm:$0xff]
    %v1232 = vld [vmem:[#allocation13 + $0x3a0] sm:$0xff]
    %v1233 = vld [vmem:[#allocation13 + $0x3a8] sm:$0xff]
    %v1234 = vld [vmem:[#allocation13 + $0x3b0] sm:$0xff]
    %v1235 = vld [vmem:[#allocation13 + $0x3b8] sm:$0xff]
    %v1236 = vld [vmem:[#allocation13 + $0x3c0] sm:$0xff]
    %v1237 = vld [vmem:[#allocation13 + $0x3c8] sm:$0xff]
    %v1238 = vld [vmem:[#allocation13 + $0x3d0] sm:$0xff]
    %v1239 = vld [vmem:[#allocation13 + $0x3d8] sm:$0xff]
    %v1240 = vld [vmem:[#allocation13 + $0x3e0] sm:$0xff]
    %v1241 = vld [vmem:[#allocation13 + $0x3e8] sm:$0xff]
    %v1242 = vld [vmem:[#allocation13 + $0x3f0] sm:$0xff]
    %v1243 = vld [vmem:[#allocation13 + $0x3f8] sm:$0xff]
    %v1244 = vld [vmem:[#allocation13 + $0x400] sm:$0xff]
    %v1245 = vld [vmem:[#allocation13 + $0x408] sm:$0xff]
    %v1246 = vld [vmem:[#allocation13 + $0x410] sm:$0xff]
    %v1247 = vld [vmem:[#allocation13 + $0x418] sm:$0xff]
    %v1248 = vld [vmem:[#allocation13 + $0x420] sm:$0xff]
    %v1249 = vld [vmem:[#allocation13 + $0x428] sm:$0xff]
    %v1250 = vld [vmem:[#allocation13 + $0x430] sm:$0xff]
    %v1251 = vld [vmem:[#allocation13 + $0x438] sm:$0xff]
    %v1252 = vld [vmem:[#allocation13 + $0x440] sm:$0xff]
    %v1253 = vld [vmem:[#allocation13 + $0x448] sm:$0xff]
    %v1254 = vld [vmem:[#allocation13 + $0x450] sm:$0xff]
    %v1255 = vld [vmem:[#allocation13 + $0x458] sm:$0xff]
    %v1256 = vld [vmem:[#allocation14] sm:$0xff]
    %v1257 = vld [vmem:[#allocation14 + $0x8] sm:$0xff]
    %v1258 = vld [vmem:[#allocation14 + $0x10] sm:$0xff]
    %v1259 = vld [vmem:[#allocation14 + $0x18] sm:$0xff]
    %v1260 = vld [vmem:[#allocation14 + $0x20] sm:$0x7]
    %v1266 = vperm.slane %v1256, 0
    %v1267 = vperm.slane %v1256, 1
    %v1268 = vperm.slane %v1256, 2
    %v1269 = vperm.slane %v1256, 3
    %v1270 = vperm.slane %v1256, 4
    %v1271 = vperm.slane %v1256, 5
    %v1272 = vperm.slane %v1256, 6
    %v1273 = vperm.slane %v1256, 7
    %v1274 = vperm.slane %v1257, 0
    %v1275 = vperm.slane %v1257, 1
    %v1276 = vperm.slane %v1257, 2
    %v1277 = vperm.slane %v1257, 3
    %v1278 = vperm.slane %v1257, 4
    %v1279 = vperm.slane %v1257, 5
    %v1280 = vperm.slane %v1257, 6
    %v1281 = vperm.slane %v1257, 7
    %v1282 = vperm.slane %v1258, 0
    %v1283 = vperm.slane %v1258, 1
    %v1284 = vperm.slane %v1258, 2
    %v1285 = vperm.slane %v1258, 3
    %v1286 = vperm.slane %v1258, 4
    %v1287 = vperm.slane %v1258, 5
    %v1288 = vperm.slane %v1258, 6
    %v1289 = vperm.slane %v1258, 7
    %v1290 = vperm.slane %v1259, 0
    %v1291 = vperm.slane %v1259, 1
    %v1292 = vperm.slane %v1259, 2
    %v1293 = vperm.slane %v1259, 3
    %v1294 = vperm.slane %v1259, 4
    %v1295 = vperm.slane %v1259, 5
    %v1296 = vperm.slane %v1259, 6
    %v1297 = vperm.slane %v1259, 7
    %v1298 = vperm.slane %v1260, 0
    %v1299 = vperm.slane %v1260, 1
    %v1300 = vperm.slane %v1260, 2
    %v1337 = vsel %vm1111, %v1104, 0
    %v1340 = vsel %vm1111, %v1106, 0
    %v1343 = vsel %vm1111, %v1108, 0
    %v1346 = vsel %vm1111, %v1110, 0
    %1348 = vmatpush.msra.mxu0 0.0
    %1349 = vmatpush.msra.mxu0 0.0
    %1350 = vmatpush.msra.mxu0 0.0
    %1351 = vmatpush.msra.mxu0 0.0
    %1352 = vmatpush.msra.mxu0 0.0
    %1353 = vmatpush.msra.mxu0 0.0
    %1354 = vmatpush.msra.mxu0 0.0
    %1355 = vmatpush.msra.mxu0 0.0
    %1356 = vmatpush.msra.mxu0 0.0
    %1357 = vmatpush.msra.mxu0 0.0
    %1358 = vmatpush.msra.mxu0 0.0
    %1359 = vmatpush.msra.mxu0 0.0
    %1360 = vmatpush.msra.mxu0 %v1221
    %1361 = vmatpush.msra.mxu0 %v1186
    %1362 = vmatpush.msra.mxu0 %v1151
    %1363 = vmatpush.msra.mxu0 %v1116
    %1364 = vmatmul.f32.gmra.mxu0 %v1337
    %v1365 = vpop.f32.mrf.mxu0
    %v1366 = vadd.f32 %v1266, %v1365
    %1367 = vmatmul.f32.gmra.mxu0 %v1340
    %v1368 = vpop.f32.mrf.mxu0
    %v1369 = vadd.f32 %v1266, %v1368
    %1370 = vmatmul.f32.gmra.mxu0 %v1343
    %v1371 = vpop.f32.mrf.mxu0
    %v1372 = vadd.f32 %v1266, %v1371
    %1373 = vmatmul.f32.gmra.mxu0 %v1346
    %v1374 = vpop.f32.mrf.mxu0
    %v1375 = vadd.f32 %v1266, %v1374
    %1376 = vdwg.mxu0
    %1377 = vmatpush.msra.mxu0 0.0
    %1378 = vmatpush.msra.mxu0 0.0
    %1379 = vmatpush.msra.mxu0 0.0
    %1380 = vmatpush.msra.mxu0 0.0
    %1381 = vmatpush.msra.mxu0 0.0
    %1382 = vmatpush.msra.mxu0 0.0
    %1383 = vmatpush.msra.mxu0 0.0
    %1384 = vmatpush.msra.mxu0 0.0
    %1385 = vmatpush.msra.mxu0 0.0
    %1386 = vmatpush.msra.mxu0 0.0
    %1387 = vmatpush.msra.mxu0 0.0
    %1388 = vmatpush.msra.mxu0 0.0
    %1389 = vmatpush.msra.mxu0 %v1222
    %1390 = vmatpush.msra.mxu0 %v1187
    %1391 = vmatpush.msra.mxu0 %v1152
    %1392 = vmatpush.msra.mxu0 %v1117
    %1393 = vmatmul.f32.gmra.mxu0 %v1337
    %v1394 = vpop.f32.mrf.mxu0
    %v1395 = vadd.f32 %v1267, %v1394
    %1396 = vmatmul.f32.gmra.mxu0 %v1340
    %v1397 = vpop.f32.mrf.mxu0
    %v1398 = vadd.f32 %v1267, %v1397
    %1399 = vmatmul.f32.gmra.mxu0 %v1343
    %v1400 = vpop.f32.mrf.mxu0
    %v1401 = vadd.f32 %v1267, %v1400
    %1402 = vmatmul.f32.gmra.mxu0 %v1346
    %v1403 = vpop.f32.mrf.mxu0
    %v1404 = vadd.f32 %v1267, %v1403
    %1405 = vdwg.mxu0
    %1406 = vmatpush.msra.mxu0 0.0
    %1407 = vmatpush.msra.mxu0 0.0
    %1408 = vmatpush.msra.mxu0 0.0
    %1409 = vmatpush.msra.mxu0 0.0
    %1410 = vmatpush.msra.mxu0 0.0
    %1411 = vmatpush.msra.mxu0 0.0
    %1412 = vmatpush.msra.mxu0 0.0
    %1413 = vmatpush.msra.mxu0 0.0
    %1414 = vmatpush.msra.mxu0 0.0
    %1415 = vmatpush.msra.mxu0 0.0
    %1416 = vmatpush.msra.mxu0 0.0
    %1417 = vmatpush.msra.mxu0 0.0
    %1418 = vmatpush.msra.mxu0 %v1223
    %1419 = vmatpush.msra.mxu0 %v1188
    %1420 = vmatpush.msra.mxu0 %v1153
    %1421 = vmatpush.msra.mxu0 %v1118
    %1422 = vmatmul.f32.gmra.mxu0 %v1337
    %v1423 = vpop.f32.mrf.mxu0
    %v1424 = vadd.f32 %v1268, %v1423
    %1425 = vmatmul.f32.gmra.mxu0 %v1340
    %v1426 = vpop.f32.mrf.mxu0
    %v1427 = vadd.f32 %v1268, %v1426
    %1428 = vmatmul.f32.gmra.mxu0 %v1343
    %v1429 = vpop.f32.mrf.mxu0
    %v1430 = vadd.f32 %v1268, %v1429
    %1431 = vmatmul.f32.gmra.mxu0 %v1346
    %v1432 = vpop.f32.mrf.mxu0
    %v1433 = vadd.f32 %v1268, %v1432
    %1434 = vdwg.mxu0
    %1435 = vmatpush.msra.mxu0 0.0
    %1436 = vmatpush.msra.mxu0 0.0
    %1437 = vmatpush.msra.mxu0 0.0
    %1438 = vmatpush.msra.mxu0 0.0
    %1439 = vmatpush.msra.mxu0 0.0
    %1440 = vmatpush.msra.mxu0 0.0
    %1441 = vmatpush.msra.mxu0 0.0
    %1442 = vmatpush.msra.mxu0 0.0
    %1443 = vmatpush.msra.mxu0 0.0
    %1444 = vmatpush.msra.mxu0 0.0
    %1445 = vmatpush.msra.mxu0 0.0
    %1446 = vmatpush.msra.mxu0 0.0
    %1447 = vmatpush.msra.mxu0 %v1224
    %1448 = vmatpush.msra.mxu0 %v1189
    %1449 = vmatpush.msra.mxu0 %v1154
    %1450 = vmatpush.msra.mxu0 %v1119
    %1451 = vmatmul.f32.gmra.mxu0 %v1337
    %v1452 = vpop.f32.mrf.mxu0
    %v1453 = vadd.f32 %v1269, %v1452
    %1454 = vmatmul.f32.gmra.mxu0 %v1340
    %v1455 = vpop.f32.mrf.mxu0
    %v1456 = vadd.f32 %v1269, %v1455
    %1457 = vmatmul.f32.gmra.mxu0 %v1343
    %v1458 = vpop.f32.mrf.mxu0
    %v1459 = vadd.f32 %v1269, %v1458
    %1460 = vmatmul.f32.gmra.mxu0 %v1346
    %v1461 = vpop.f32.mrf.mxu0
    %v1462 = vadd.f32 %v1269, %v1461
    %1463 = vdwg.mxu0
    %1464 = vmatpush.msra.mxu0 0.0
    %1465 = vmatpush.msra.mxu0 0.0
    %1466 = vmatpush.msra.mxu0 0.0
    %1467 = vmatpush.msra.mxu0 0.0
    %1468 = vmatpush.msra.mxu0 0.0
    %1469 = vmatpush.msra.mxu0 0.0
    %1470 = vmatpush.msra.mxu0 0.0
    %1471 = vmatpush.msra.mxu0 0.0
    %1472 = vmatpush.msra.mxu0 0.0
    %1473 = vmatpush.msra.mxu0 0.0
    %1474 = vmatpush.msra.mxu0 0.0
    %1475 = vmatpush.msra.mxu0 0.0
    %1476 = vmatpush.msra.mxu0 %v1225
    %1477 = vmatpush.msra.mxu0 %v1190
    %1478 = vmatpush.msra.mxu0 %v1155
    %1479 = vmatpush.msra.mxu0 %v1120
    %1480 = vmatmul.f32.gmra.mxu0 %v1337
    %v1481 = vpop.f32.mrf.mxu0
    %v1482 = vadd.f32 %v1270, %v1481
    %1483 = vmatmul.f32.gmra.mxu0 %v1340
    %v1484 = vpop.f32.mrf.mxu0
    %v1485 = vadd.f32 %v1270, %v1484
    %1486 = vmatmul.f32.gmra.mxu0 %v1343
    %v1487 = vpop.f32.mrf.mxu0
    %v1488 = vadd.f32 %v1270, %v1487
    %1489 = vmatmul.f32.gmra.mxu0 %v1346
    %v1490 = vpop.f32.mrf.mxu0
    %v1491 = vadd.f32 %v1270, %v1490
    %1492 = vdwg.mxu0
    %1493 = vmatpush.msra.mxu0 0.0
    %1494 = vmatpush.msra.mxu0 0.0
    %1495 = vmatpush.msra.mxu0 0.0
    %1496 = vmatpush.msra.mxu0 0.0
    %1497 = vmatpush.msra.mxu0 0.0
    %1498 = vmatpush.msra.mxu0 0.0
    %1499 = vmatpush.msra.mxu0 0.0
    %1500 = vmatpush.msra.mxu0 0.0
    %1501 = vmatpush.msra.mxu0 0.0
    %1502 = vmatpush.msra.mxu0 0.0
    %1503 = vmatpush.msra.mxu0 0.0
    %1504 = vmatpush.msra.mxu0 0.0
    %1505 = vmatpush.msra.mxu0 %v1226
    %1506 = vmatpush.msra.mxu0 %v1191
    %1507 = vmatpush.msra.mxu0 %v1156
    %1508 = vmatpush.msra.mxu0 %v1121
    %1509 = vmatmul.f32.gmra.mxu0 %v1337
    %v1510 = vpop.f32.mrf.mxu0
    %v1511 = vadd.f32 %v1271, %v1510
    %1512 = vmatmul.f32.gmra.mxu0 %v1340
    %v1513 = vpop.f32.mrf.mxu0
    %v1514 = vadd.f32 %v1271, %v1513
    %1515 = vmatmul.f32.gmra.mxu0 %v1343
    %v1516 = vpop.f32.mrf.mxu0
    %v1517 = vadd.f32 %v1271, %v1516
    %1518 = vmatmul.f32.gmra.mxu0 %v1346
    %v1519 = vpop.f32.mrf.mxu0
    %v1520 = vadd.f32 %v1271, %v1519
    %1521 = vdwg.mxu0
    %1522 = vmatpush.msra.mxu0 0.0
    %1523 = vmatpush.msra.mxu0 0.0
    %1524 = vmatpush.msra.mxu0 0.0
    %1525 = vmatpush.msra.mxu0 0.0
    %1526 = vmatpush.msra.mxu0 0.0
    %1527 = vmatpush.msra.mxu0 0.0
    %1528 = vmatpush.msra.mxu0 0.0
    %1529 = vmatpush.msra.mxu0 0.0
    %1530 = vmatpush.msra.mxu0 0.0
    %1531 = vmatpush.msra.mxu0 0.0
    %1532 = vmatpush.msra.mxu0 0.0
    %1533 = vmatpush.msra.mxu0 0.0
    %1534 = vmatpush.msra.mxu0 %v1227
    %1535 = vmatpush.msra.mxu0 %v1192
    %1536 = vmatpush.msra.mxu0 %v1157
    %1537 = vmatpush.msra.mxu0 %v1122
    %1538 = vmatmul.f32.gmra.mxu0 %v1337
    %v1539 = vpop.f32.mrf.mxu0
    %v1540 = vadd.f32 %v1272, %v1539
    %1541 = vmatmul.f32.gmra.mxu0 %v1340
    %v1542 = vpop.f32.mrf.mxu0
    %v1543 = vadd.f32 %v1272, %v1542
    %1544 = vmatmul.f32.gmra.mxu0 %v1343
    %v1545 = vpop.f32.mrf.mxu0
    %v1546 = vadd.f32 %v1272, %v1545
    %1547 = vmatmul.f32.gmra.mxu0 %v1346
    %v1548 = vpop.f32.mrf.mxu0
    %v1549 = vadd.f32 %v1272, %v1548
    %1550 = vdwg.mxu0
    %1551 = vmatpush.msra.mxu0 0.0
    %1552 = vmatpush.msra.mxu0 0.0
    %1553 = vmatpush.msra.mxu0 0.0
    %1554 = vmatpush.msra.mxu0 0.0
    %1555 = vmatpush.msra.mxu0 0.0
    %1556 = vmatpush.msra.mxu0 0.0
    %1557 = vmatpush.msra.mxu0 0.0
    %1558 = vmatpush.msra.mxu0 0.0
    %1559 = vmatpush.msra.mxu0 0.0
    %1560 = vmatpush.msra.mxu0 0.0
    %1561 = vmatpush.msra.mxu0 0.0
    %1562 = vmatpush.msra.mxu0 0.0
    %1563 = vmatpush.msra.mxu0 %v1228
    %1564 = vmatpush.msra.mxu0 %v1193
    %1565 = vmatpush.msra.mxu0 %v1158
    %1566 = vmatpush.msra.mxu0 %v1123
    %1567 = vmatmul.f32.gmra.mxu0 %v1337
    %v1568 = vpop.f32.mrf.mxu0
    %v1569 = vadd.f32 %v1273, %v1568
    %1570 = vmatmul.f32.gmra.mxu0 %v1340
    %v1571 = vpop.f32.mrf.mxu0
    %v1572 = vadd.f32 %v1273, %v1571
    %1573 = vmatmul.f32.gmra.mxu0 %v1343
    %v1574 = vpop.f32.mrf.mxu0
    %v1575 = vadd.f32 %v1273, %v1574
    %1576 = vmatmul.f32.gmra.mxu0 %v1346
    %v1577 = vpop.f32.mrf.mxu0
    %v1578 = vadd.f32 %v1273, %v1577
    %1579 = vdwg.mxu0
    %1580 = vmatpush.msra.mxu0 0.0
    %1581 = vmatpush.msra.mxu0 0.0
    %1582 = vmatpush.msra.mxu0 0.0
    %1583 = vmatpush.msra.mxu0 0.0
    %1584 = vmatpush.msra.mxu0 0.0
    %1585 = vmatpush.msra.mxu0 0.0
    %1586 = vmatpush.msra.mxu0 0.0
    %1587 = vmatpush.msra.mxu0 0.0
    %1588 = vmatpush.msra.mxu0 0.0
    %1589 = vmatpush.msra.mxu0 0.0
    %1590 = vmatpush.msra.mxu0 0.0
    %1591 = vmatpush.msra.mxu0 0.0
    %1592 = vmatpush.msra.mxu0 %v1229
    %1593 = vmatpush.msra.mxu0 %v1194
    %1594 = vmatpush.msra.mxu0 %v1159
    %1595 = vmatpush.msra.mxu0 %v1124
    %1596 = vmatmul.f32.gmra.mxu0 %v1337
    %v1597 = vpop.f32.mrf.mxu0
    %v1598 = vadd.f32 %v1274, %v1597
    %1599 = vmatmul.f32.gmra.mxu0 %v1340
    %v1600 = vpop.f32.mrf.mxu0
    %v1601 = vadd.f32 %v1274, %v1600
    %1602 = vmatmul.f32.gmra.mxu0 %v1343
    %v1603 = vpop.f32.mrf.mxu0
    %v1604 = vadd.f32 %v1274, %v1603
    %1605 = vmatmul.f32.gmra.mxu0 %v1346
    %v1606 = vpop.f32.mrf.mxu0
    %v1607 = vadd.f32 %v1274, %v1606
    %1608 = vdwg.mxu0
    %1609 = vmatpush.msra.mxu0 0.0
    %1610 = vmatpush.msra.mxu0 0.0
    %1611 = vmatpush.msra.mxu0 0.0
    %1612 = vmatpush.msra.mxu0 0.0
    %1613 = vmatpush.msra.mxu0 0.0
    %1614 = vmatpush.msra.mxu0 0.0
    %1615 = vmatpush.msra.mxu0 0.0
    %1616 = vmatpush.msra.mxu0 0.0
    %1617 = vmatpush.msra.mxu0 0.0
    %1618 = vmatpush.msra.mxu0 0.0
    %1619 = vmatpush.msra.mxu0 0.0
    %1620 = vmatpush.msra.mxu0 0.0
    %1621 = vmatpush.msra.mxu0 %v1230
    %1622 = vmatpush.msra.mxu0 %v1195
    %1623 = vmatpush.msra.mxu0 %v1160
    %1624 = vmatpush.msra.mxu0 %v1125
    %1625 = vmatmul.f32.gmra.mxu0 %v1337
    %v1626 = vpop.f32.mrf.mxu0
    %v1627 = vadd.f32 %v1275, %v1626
    %1628 = vmatmul.f32.gmra.mxu0 %v1340
    %v1629 = vpop.f32.mrf.mxu0
    %v1630 = vadd.f32 %v1275, %v1629
    %1631 = vmatmul.f32.gmra.mxu0 %v1343
    %v1632 = vpop.f32.mrf.mxu0
    %v1633 = vadd.f32 %v1275, %v1632
    %1634 = vmatmul.f32.gmra.mxu0 %v1346
    %v1635 = vpop.f32.mrf.mxu0
    %v1636 = vadd.f32 %v1275, %v1635
    %1637 = vdwg.mxu0
    %1638 = vmatpush.msra.mxu0 0.0
    %1639 = vmatpush.msra.mxu0 0.0
    %1640 = vmatpush.msra.mxu0 0.0
    %1641 = vmatpush.msra.mxu0 0.0
    %1642 = vmatpush.msra.mxu0 0.0
    %1643 = vmatpush.msra.mxu0 0.0
    %1644 = vmatpush.msra.mxu0 0.0
    %1645 = vmatpush.msra.mxu0 0.0
    %1646 = vmatpush.msra.mxu0 0.0
    %1647 = vmatpush.msra.mxu0 0.0
    %1648 = vmatpush.msra.mxu0 0.0
    %1649 = vmatpush.msra.mxu0 0.0
    %1650 = vmatpush.msra.mxu0 %v1231
    %1651 = vmatpush.msra.mxu0 %v1196
    %1652 = vmatpush.msra.mxu0 %v1161
    %1653 = vmatpush.msra.mxu0 %v1126
    %1654 = vmatmul.f32.gmra.mxu0 %v1337
    %v1655 = vpop.f32.mrf.mxu0
    %v1656 = vadd.f32 %v1276, %v1655
    %1657 = vmatmul.f32.gmra.mxu0 %v1340
    %v1658 = vpop.f32.mrf.mxu0
    %v1659 = vadd.f32 %v1276, %v1658
    %1660 = vmatmul.f32.gmra.mxu0 %v1343
    %v1661 = vpop.f32.mrf.mxu0
    %v1662 = vadd.f32 %v1276, %v1661
    %1663 = vmatmul.f32.gmra.mxu0 %v1346
    %v1664 = vpop.f32.mrf.mxu0
    %v1665 = vadd.f32 %v1276, %v1664
    %1666 = vdwg.mxu0
    %1667 = vmatpush.msra.mxu0 0.0
    %1668 = vmatpush.msra.mxu0 0.0
    %1669 = vmatpush.msra.mxu0 0.0
    %1670 = vmatpush.msra.mxu0 0.0
    %1671 = vmatpush.msra.mxu0 0.0
    %1672 = vmatpush.msra.mxu0 0.0
    %1673 = vmatpush.msra.mxu0 0.0
    %1674 = vmatpush.msra.mxu0 0.0
    %1675 = vmatpush.msra.mxu0 0.0
    %1676 = vmatpush.msra.mxu0 0.0
    %1677 = vmatpush.msra.mxu0 0.0
    %1678 = vmatpush.msra.mxu0 0.0
    %1679 = vmatpush.msra.mxu0 %v1232
    %1680 = vmatpush.msra.mxu0 %v1197
    %1681 = vmatpush.msra.mxu0 %v1162
    %1682 = vmatpush.msra.mxu0 %v1127
    %1683 = vmatmul.f32.gmra.mxu0 %v1337
    %v1684 = vpop.f32.mrf.mxu0
    %v1685 = vadd.f32 %v1277, %v1684
    %1686 = vmatmul.f32.gmra.mxu0 %v1340
    %v1687 = vpop.f32.mrf.mxu0
    %v1688 = vadd.f32 %v1277, %v1687
    %1689 = vmatmul.f32.gmra.mxu0 %v1343
    %v1690 = vpop.f32.mrf.mxu0
    %v1691 = vadd.f32 %v1277, %v1690
    %1692 = vmatmul.f32.gmra.mxu0 %v1346
    %v1693 = vpop.f32.mrf.mxu0
    %v1694 = vadd.f32 %v1277, %v1693
    %1695 = vdwg.mxu0
    %1696 = vmatpush.msra.mxu0 0.0
    %1697 = vmatpush.msra.mxu0 0.0
    %1698 = vmatpush.msra.mxu0 0.0
    %1699 = vmatpush.msra.mxu0 0.0
    %1700 = vmatpush.msra.mxu0 0.0
    %1701 = vmatpush.msra.mxu0 0.0
    %1702 = vmatpush.msra.mxu0 0.0
    %1703 = vmatpush.msra.mxu0 0.0
    %1704 = vmatpush.msra.mxu0 0.0
    %1705 = vmatpush.msra.mxu0 0.0
    %1706 = vmatpush.msra.mxu0 0.0
    %1707 = vmatpush.msra.mxu0 0.0
    %1708 = vmatpush.msra.mxu0 %v1233
    %1709 = vmatpush.msra.mxu0 %v1198
    %1710 = vmatpush.msra.mxu0 %v1163
    %1711 = vmatpush.msra.mxu0 %v1128
    %1712 = vmatmul.f32.gmra.mxu0 %v1337
    %v1713 = vpop.f32.mrf.mxu0
    %v1714 = vadd.f32 %v1278, %v1713
    %1715 = vmatmul.f32.gmra.mxu0 %v1340
    %v1716 = vpop.f32.mrf.mxu0
    %v1717 = vadd.f32 %v1278, %v1716
    %1718 = vmatmul.f32.gmra.mxu0 %v1343
    %v1719 = vpop.f32.mrf.mxu0
    %v1720 = vadd.f32 %v1278, %v1719
    %1721 = vmatmul.f32.gmra.mxu0 %v1346
    %v1722 = vpop.f32.mrf.mxu0
    %v1723 = vadd.f32 %v1278, %v1722
    %1724 = vdwg.mxu0
    %1725 = vmatpush.msra.mxu0 0.0
    %1726 = vmatpush.msra.mxu0 0.0
    %1727 = vmatpush.msra.mxu0 0.0
    %1728 = vmatpush.msra.mxu0 0.0
    %1729 = vmatpush.msra.mxu0 0.0
    %1730 = vmatpush.msra.mxu0 0.0
    %1731 = vmatpush.msra.mxu0 0.0
    %1732 = vmatpush.msra.mxu0 0.0
    %1733 = vmatpush.msra.mxu0 0.0
    %1734 = vmatpush.msra.mxu0 0.0
    %1735 = vmatpush.msra.mxu0 0.0
    %1736 = vmatpush.msra.mxu0 0.0
    %1737 = vmatpush.msra.mxu0 %v1234
    %1738 = vmatpush.msra.mxu0 %v1199
    %1739 = vmatpush.msra.mxu0 %v1164
    %1740 = vmatpush.msra.mxu0 %v1129
    %1741 = vmatmul.f32.gmra.mxu0 %v1337
    %v1742 = vpop.f32.mrf.mxu0
    %v1743 = vadd.f32 %v1279, %v1742
    %1744 = vmatmul.f32.gmra.mxu0 %v1340
    %v1745 = vpop.f32.mrf.mxu0
    %v1746 = vadd.f32 %v1279, %v1745
    %1747 = vmatmul.f32.gmra.mxu0 %v1343
    %v1748 = vpop.f32.mrf.mxu0
    %v1749 = vadd.f32 %v1279, %v1748
    %1750 = vmatmul.f32.gmra.mxu0 %v1346
    %v1751 = vpop.f32.mrf.mxu0
    %v1752 = vadd.f32 %v1279, %v1751
    %1753 = vdwg.mxu0
    %1754 = vmatpush.msra.mxu0 0.0
    %1755 = vmatpush.msra.mxu0 0.0
    %1756 = vmatpush.msra.mxu0 0.0
    %1757 = vmatpush.msra.mxu0 0.0
    %1758 = vmatpush.msra.mxu0 0.0
    %1759 = vmatpush.msra.mxu0 0.0
    %1760 = vmatpush.msra.mxu0 0.0
    %1761 = vmatpush.msra.mxu0 0.0
    %1762 = vmatpush.msra.mxu0 0.0
    %1763 = vmatpush.msra.mxu0 0.0
    %1764 = vmatpush.msra.mxu0 0.0
    %1765 = vmatpush.msra.mxu0 0.0
    %1766 = vmatpush.msra.mxu0 %v1235
    %1767 = vmatpush.msra.mxu0 %v1200
    %1768 = vmatpush.msra.mxu0 %v1165
    %1769 = vmatpush.msra.mxu0 %v1130
    %1770 = vmatmul.f32.gmra.mxu0 %v1337
    %v1771 = vpop.f32.mrf.mxu0
    %v1772 = vadd.f32 %v1280, %v1771
    %1773 = vmatmul.f32.gmra.mxu0 %v1340
    %v1774 = vpop.f32.mrf.mxu0
    %v1775 = vadd.f32 %v1280, %v1774
    %1776 = vmatmul.f32.gmra.mxu0 %v1343
    %v1777 = vpop.f32.mrf.mxu0
    %v1778 = vadd.f32 %v1280, %v1777
    %1779 = vmatmul.f32.gmra.mxu0 %v1346
    %v1780 = vpop.f32.mrf.mxu0
    %v1781 = vadd.f32 %v1280, %v1780
    %1782 = vdwg.mxu0
    %1783 = vmatpush.msra.mxu0 0.0
    %1784 = vmatpush.msra.mxu0 0.0
    %1785 = vmatpush.msra.mxu0 0.0
    %1786 = vmatpush.msra.mxu0 0.0
    %1787 = vmatpush.msra.mxu0 0.0
    %1788 = vmatpush.msra.mxu0 0.0
    %1789 = vmatpush.msra.mxu0 0.0
    %1790 = vmatpush.msra.mxu0 0.0
    %1791 = vmatpush.msra.mxu0 0.0
    %1792 = vmatpush.msra.mxu0 0.0
    %1793 = vmatpush.msra.mxu0 0.0
    %1794 = vmatpush.msra.mxu0 0.0
    %1795 = vmatpush.msra.mxu0 %v1236
    %1796 = vmatpush.msra.mxu0 %v1201
    %1797 = vmatpush.msra.mxu0 %v1166
    %1798 = vmatpush.msra.mxu0 %v1131
    %1799 = vmatmul.f32.gmra.mxu0 %v1337
    %v1800 = vpop.f32.mrf.mxu0
    %v1801 = vadd.f32 %v1281, %v1800
    %1802 = vmatmul.f32.gmra.mxu0 %v1340
    %v1803 = vpop.f32.mrf.mxu0
    %v1804 = vadd.f32 %v1281, %v1803
    %1805 = vmatmul.f32.gmra.mxu0 %v1343
    %v1806 = vpop.f32.mrf.mxu0
    %v1807 = vadd.f32 %v1281, %v1806
    %1808 = vmatmul.f32.gmra.mxu0 %v1346
    %v1809 = vpop.f32.mrf.mxu0
    %v1810 = vadd.f32 %v1281, %v1809
    %1811 = vdwg.mxu0
    %1812 = vmatpush.msra.mxu0 0.0
    %1813 = vmatpush.msra.mxu0 0.0
    %1814 = vmatpush.msra.mxu0 0.0
    %1815 = vmatpush.msra.mxu0 0.0
    %1816 = vmatpush.msra.mxu0 0.0
    %1817 = vmatpush.msra.mxu0 0.0
    %1818 = vmatpush.msra.mxu0 0.0
    %1819 = vmatpush.msra.mxu0 0.0
    %1820 = vmatpush.msra.mxu0 0.0
    %1821 = vmatpush.msra.mxu0 0.0
    %1822 = vmatpush.msra.mxu0 0.0
    %1823 = vmatpush.msra.mxu0 0.0
    %1824 = vmatpush.msra.mxu0 %v1237
    %1825 = vmatpush.msra.mxu0 %v1202
    %1826 = vmatpush.msra.mxu0 %v1167
    %1827 = vmatpush.msra.mxu0 %v1132
    %1828 = vmatmul.f32.gmra.mxu0 %v1337
    %v1829 = vpop.f32.mrf.mxu0
    %v1830 = vadd.f32 %v1282, %v1829
    %1831 = vmatmul.f32.gmra.mxu0 %v1340
    %v1832 = vpop.f32.mrf.mxu0
    %v1833 = vadd.f32 %v1282, %v1832
    %1834 = vmatmul.f32.gmra.mxu0 %v1343
    %v1835 = vpop.f32.mrf.mxu0
    %v1836 = vadd.f32 %v1282, %v1835
    %1837 = vmatmul.f32.gmra.mxu0 %v1346
    %v1838 = vpop.f32.mrf.mxu0
    %v1839 = vadd.f32 %v1282, %v1838
    %1840 = vdwg.mxu0
    %1841 = vmatpush.msra.mxu0 0.0
    %1842 = vmatpush.msra.mxu0 0.0
    %1843 = vmatpush.msra.mxu0 0.0
    %1844 = vmatpush.msra.mxu0 0.0
    %1845 = vmatpush.msra.mxu0 0.0
    %1846 = vmatpush.msra.mxu0 0.0
    %1847 = vmatpush.msra.mxu0 0.0
    %1848 = vmatpush.msra.mxu0 0.0
    %1849 = vmatpush.msra.mxu0 0.0
    %1850 = vmatpush.msra.mxu0 0.0
    %1851 = vmatpush.msra.mxu0 0.0
    %1852 = vmatpush.msra.mxu0 0.0
    %1853 = vmatpush.msra.mxu0 %v1238
    %1854 = vmatpush.msra.mxu0 %v1203
    %1855 = vmatpush.msra.mxu0 %v1168
    %1856 = vmatpush.msra.mxu0 %v1133
    %1857 = vmatmul.f32.gmra.mxu0 %v1337
    %v1858 = vpop.f32.mrf.mxu0
    %v1859 = vadd.f32 %v1283, %v1858
    %1860 = vmatmul.f32.gmra.mxu0 %v1340
    %v1861 = vpop.f32.mrf.mxu0
    %v1862 = vadd.f32 %v1283, %v1861
    %1863 = vmatmul.f32.gmra.mxu0 %v1343
    %v1864 = vpop.f32.mrf.mxu0
    %v1865 = vadd.f32 %v1283, %v1864
    %1866 = vmatmul.f32.gmra.mxu0 %v1346
    %v1867 = vpop.f32.mrf.mxu0
    %v1868 = vadd.f32 %v1283, %v1867
    %1869 = vdwg.mxu0
    %1870 = vmatpush.msra.mxu0 0.0
    %1871 = vmatpush.msra.mxu0 0.0
    %1872 = vmatpush.msra.mxu0 0.0
    %1873 = vmatpush.msra.mxu0 0.0
    %1874 = vmatpush.msra.mxu0 0.0
    %1875 = vmatpush.msra.mxu0 0.0
    %1876 = vmatpush.msra.mxu0 0.0
    %1877 = vmatpush.msra.mxu0 0.0
    %1878 = vmatpush.msra.mxu0 0.0
    %1879 = vmatpush.msra.mxu0 0.0
    %1880 = vmatpush.msra.mxu0 0.0
    %1881 = vmatpush.msra.mxu0 0.0
    %1882 = vmatpush.msra.mxu0 %v1239
    %1883 = vmatpush.msra.mxu0 %v1204
    %1884 = vmatpush.msra.mxu0 %v1169
    %1885 = vmatpush.msra.mxu0 %v1134
    %1886 = vmatmul.f32.gmra.mxu0 %v1337
    %v1887 = vpop.f32.mrf.mxu0
    %v1888 = vadd.f32 %v1284, %v1887
    %1889 = vmatmul.f32.gmra.mxu0 %v1340
    %v1890 = vpop.f32.mrf.mxu0
    %v1891 = vadd.f32 %v1284, %v1890
    %1892 = vmatmul.f32.gmra.mxu0 %v1343
    %v1893 = vpop.f32.mrf.mxu0
    %v1894 = vadd.f32 %v1284, %v1893
    %1895 = vmatmul.f32.gmra.mxu0 %v1346
    %v1896 = vpop.f32.mrf.mxu0
    %v1897 = vadd.f32 %v1284, %v1896
    %1898 = vdwg.mxu0
    %1899 = vmatpush.msra.mxu0 0.0
    %1900 = vmatpush.msra.mxu0 0.0
    %1901 = vmatpush.msra.mxu0 0.0
    %1902 = vmatpush.msra.mxu0 0.0
    %1903 = vmatpush.msra.mxu0 0.0
    %1904 = vmatpush.msra.mxu0 0.0
    %1905 = vmatpush.msra.mxu0 0.0
    %1906 = vmatpush.msra.mxu0 0.0
    %1907 = vmatpush.msra.mxu0 0.0
    %1908 = vmatpush.msra.mxu0 0.0
    %1909 = vmatpush.msra.mxu0 0.0
    %1910 = vmatpush.msra.mxu0 0.0
    %1911 = vmatpush.msra.mxu0 %v1240
    %1912 = vmatpush.msra.mxu0 %v1205
    %1913 = vmatpush.msra.mxu0 %v1170
    %1914 = vmatpush.msra.mxu0 %v1135
    %1915 = vmatmul.f32.gmra.mxu0 %v1337
    %v1916 = vpop.f32.mrf.mxu0
    %v1917 = vadd.f32 %v1285, %v1916
    %1918 = vmatmul.f32.gmra.mxu0 %v1340
    %v1919 = vpop.f32.mrf.mxu0
    %v1920 = vadd.f32 %v1285, %v1919
    %1921 = vmatmul.f32.gmra.mxu0 %v1343
    %v1922 = vpop.f32.mrf.mxu0
    %v1923 = vadd.f32 %v1285, %v1922
    %1924 = vmatmul.f32.gmra.mxu0 %v1346
    %v1925 = vpop.f32.mrf.mxu0
    %v1926 = vadd.f32 %v1285, %v1925
    %1927 = vdwg.mxu0
    %1928 = vmatpush.msra.mxu0 0.0
    %1929 = vmatpush.msra.mxu0 0.0
    %1930 = vmatpush.msra.mxu0 0.0
    %1931 = vmatpush.msra.mxu0 0.0
    %1932 = vmatpush.msra.mxu0 0.0
    %1933 = vmatpush.msra.mxu0 0.0
    %1934 = vmatpush.msra.mxu0 0.0
    %1935 = vmatpush.msra.mxu0 0.0
    %1936 = vmatpush.msra.mxu0 0.0
    %1937 = vmatpush.msra.mxu0 0.0
    %1938 = vmatpush.msra.mxu0 0.0
    %1939 = vmatpush.msra.mxu0 0.0
    %1940 = vmatpush.msra.mxu0 %v1241
    %1941 = vmatpush.msra.mxu0 %v1206
    %1942 = vmatpush.msra.mxu0 %v1171
    %1943 = vmatpush.msra.mxu0 %v1136
    %1944 = vmatmul.f32.gmra.mxu0 %v1337
    %v1945 = vpop.f32.mrf.mxu0
    %v1946 = vadd.f32 %v1286, %v1945
    %1947 = vmatmul.f32.gmra.mxu0 %v1340
    %v1948 = vpop.f32.mrf.mxu0
    %v1949 = vadd.f32 %v1286, %v1948
    %1950 = vmatmul.f32.gmra.mxu0 %v1343
    %v1951 = vpop.f32.mrf.mxu0
    %v1952 = vadd.f32 %v1286, %v1951
    %1953 = vmatmul.f32.gmra.mxu0 %v1346
    %v1954 = vpop.f32.mrf.mxu0
    %v1955 = vadd.f32 %v1286, %v1954
    %1956 = vdwg.mxu0
    %1957 = vmatpush.msra.mxu0 0.0
    %1958 = vmatpush.msra.mxu0 0.0
    %1959 = vmatpush.msra.mxu0 0.0
    %1960 = vmatpush.msra.mxu0 0.0
    %1961 = vmatpush.msra.mxu0 0.0
    %1962 = vmatpush.msra.mxu0 0.0
    %1963 = vmatpush.msra.mxu0 0.0
    %1964 = vmatpush.msra.mxu0 0.0
    %1965 = vmatpush.msra.mxu0 0.0
    %1966 = vmatpush.msra.mxu0 0.0
    %1967 = vmatpush.msra.mxu0 0.0
    %1968 = vmatpush.msra.mxu0 0.0
    %1969 = vmatpush.msra.mxu0 %v1242
    %1970 = vmatpush.msra.mxu0 %v1207
    %1971 = vmatpush.msra.mxu0 %v1172
    %1972 = vmatpush.msra.mxu0 %v1137
    %1973 = vmatmul.f32.gmra.mxu0 %v1337
    %v1974 = vpop.f32.mrf.mxu0
    %v1975 = vadd.f32 %v1287, %v1974
    %1976 = vmatmul.f32.gmra.mxu0 %v1340
    %v1977 = vpop.f32.mrf.mxu0
    %v1978 = vadd.f32 %v1287, %v1977
    %1979 = vmatmul.f32.gmra.mxu0 %v1343
    %v1980 = vpop.f32.mrf.mxu0
    %v1981 = vadd.f32 %v1287, %v1980
    %1982 = vmatmul.f32.gmra.mxu0 %v1346
    %v1983 = vpop.f32.mrf.mxu0
    %v1984 = vadd.f32 %v1287, %v1983
    %1985 = vdwg.mxu0
    %1986 = vmatpush.msra.mxu0 0.0
    %1987 = vmatpush.msra.mxu0 0.0
    %1988 = vmatpush.msra.mxu0 0.0
    %1989 = vmatpush.msra.mxu0 0.0
    %1990 = vmatpush.msra.mxu0 0.0
    %1991 = vmatpush.msra.mxu0 0.0
    %1992 = vmatpush.msra.mxu0 0.0
    %1993 = vmatpush.msra.mxu0 0.0
    %1994 = vmatpush.msra.mxu0 0.0
    %1995 = vmatpush.msra.mxu0 0.0
    %1996 = vmatpush.msra.mxu0 0.0
    %1997 = vmatpush.msra.mxu0 0.0
    %1998 = vmatpush.msra.mxu0 %v1243
    %1999 = vmatpush.msra.mxu0 %v1208
    %2000 = vmatpush.msra.mxu0 %v1173
    %2001 = vmatpush.msra.mxu0 %v1138
    %2002 = vmatmul.f32.gmra.mxu0 %v1337
    %v2003 = vpop.f32.mrf.mxu0
    %v2004 = vadd.f32 %v1288, %v2003
    %2005 = vmatmul.f32.gmra.mxu0 %v1340
    %v2006 = vpop.f32.mrf.mxu0
    %v2007 = vadd.f32 %v1288, %v2006
    %2008 = vmatmul.f32.gmra.mxu0 %v1343
    %v2009 = vpop.f32.mrf.mxu0
    %v2010 = vadd.f32 %v1288, %v2009
    %2011 = vmatmul.f32.gmra.mxu0 %v1346
    %v2012 = vpop.f32.mrf.mxu0
    %v2013 = vadd.f32 %v1288, %v2012
    %2014 = vdwg.mxu0
    %2015 = vmatpush.msra.mxu0 0.0
    %2016 = vmatpush.msra.mxu0 0.0
    %2017 = vmatpush.msra.mxu0 0.0
    %2018 = vmatpush.msra.mxu0 0.0
    %2019 = vmatpush.msra.mxu0 0.0
    %2020 = vmatpush.msra.mxu0 0.0
    %2021 = vmatpush.msra.mxu0 0.0
    %2022 = vmatpush.msra.mxu0 0.0
    %2023 = vmatpush.msra.mxu0 0.0
    %2024 = vmatpush.msra.mxu0 0.0
    %2025 = vmatpush.msra.mxu0 0.0
    %2026 = vmatpush.msra.mxu0 0.0
    %2027 = vmatpush.msra.mxu0 %v1244
    %2028 = vmatpush.msra.mxu0 %v1209
    %2029 = vmatpush.msra.mxu0 %v1174
    %2030 = vmatpush.msra.mxu0 %v1139
    %2031 = vmatmul.f32.gmra.mxu0 %v1337
    %v2032 = vpop.f32.mrf.mxu0
    %v2033 = vadd.f32 %v1289, %v2032
    %2034 = vmatmul.f32.gmra.mxu0 %v1340
    %v2035 = vpop.f32.mrf.mxu0
    %v2036 = vadd.f32 %v1289, %v2035
    %2037 = vmatmul.f32.gmra.mxu0 %v1343
    %v2038 = vpop.f32.mrf.mxu0
    %v2039 = vadd.f32 %v1289, %v2038
    %2040 = vmatmul.f32.gmra.mxu0 %v1346
    %v2041 = vpop.f32.mrf.mxu0
    %v2042 = vadd.f32 %v1289, %v2041
    %2043 = vdwg.mxu0
    %2044 = vmatpush.msra.mxu0 0.0
    %2045 = vmatpush.msra.mxu0 0.0
    %2046 = vmatpush.msra.mxu0 0.0
    %2047 = vmatpush.msra.mxu0 0.0
    %2048 = vmatpush.msra.mxu0 0.0
    %2049 = vmatpush.msra.mxu0 0.0
    %2050 = vmatpush.msra.mxu0 0.0
    %2051 = vmatpush.msra.mxu0 0.0
    %2052 = vmatpush.msra.mxu0 0.0
    %2053 = vmatpush.msra.mxu0 0.0
    %2054 = vmatpush.msra.mxu0 0.0
    %2055 = vmatpush.msra.mxu0 0.0
    %2056 = vmatpush.msra.mxu0 %v1245
    %2057 = vmatpush.msra.mxu0 %v1210
    %2058 = vmatpush.msra.mxu0 %v1175
    %2059 = vmatpush.msra.mxu0 %v1140
    %2060 = vmatmul.f32.gmra.mxu0 %v1337
    %v2061 = vpop.f32.mrf.mxu0
    %v2062 = vadd.f32 %v1290, %v2061
    %2063 = vmatmul.f32.gmra.mxu0 %v1340
    %v2064 = vpop.f32.mrf.mxu0
    %v2065 = vadd.f32 %v1290, %v2064
    %2066 = vmatmul.f32.gmra.mxu0 %v1343
    %v2067 = vpop.f32.mrf.mxu0
    %v2068 = vadd.f32 %v1290, %v2067
    %2069 = vmatmul.f32.gmra.mxu0 %v1346
    %v2070 = vpop.f32.mrf.mxu0
    %v2071 = vadd.f32 %v1290, %v2070
    %2072 = vdwg.mxu0
    %2073 = vmatpush.msra.mxu0 0.0
    %2074 = vmatpush.msra.mxu0 0.0
    %2075 = vmatpush.msra.mxu0 0.0
    %2076 = vmatpush.msra.mxu0 0.0
    %2077 = vmatpush.msra.mxu0 0.0
    %2078 = vmatpush.msra.mxu0 0.0
    %2079 = vmatpush.msra.mxu0 0.0
    %2080 = vmatpush.msra.mxu0 0.0
    %2081 = vmatpush.msra.mxu0 0.0
    %2082 = vmatpush.msra.mxu0 0.0
    %2083 = vmatpush.msra.mxu0 0.0
    %2084 = vmatpush.msra.mxu0 0.0
    %2085 = vmatpush.msra.mxu0 %v1246
    %2086 = vmatpush.msra.mxu0 %v1211
    %2087 = vmatpush.msra.mxu0 %v1176
    %2088 = vmatpush.msra.mxu0 %v1141
    %2089 = vmatmul.f32.gmra.mxu0 %v1337
    %v2090 = vpop.f32.mrf.mxu0
    %v2091 = vadd.f32 %v1291, %v2090
    %2092 = vmatmul.f32.gmra.mxu0 %v1340
    %v2093 = vpop.f32.mrf.mxu0
    %v2094 = vadd.f32 %v1291, %v2093
    %2095 = vmatmul.f32.gmra.mxu0 %v1343
    %v2096 = vpop.f32.mrf.mxu0
    %v2097 = vadd.f32 %v1291, %v2096
    %2098 = vmatmul.f32.gmra.mxu0 %v1346
    %v2099 = vpop.f32.mrf.mxu0
    %v2100 = vadd.f32 %v1291, %v2099
    %2101 = vdwg.mxu0
    %2102 = vmatpush.msra.mxu0 0.0
    %2103 = vmatpush.msra.mxu0 0.0
    %2104 = vmatpush.msra.mxu0 0.0
    %2105 = vmatpush.msra.mxu0 0.0
    %2106 = vmatpush.msra.mxu0 0.0
    %2107 = vmatpush.msra.mxu0 0.0
    %2108 = vmatpush.msra.mxu0 0.0
    %2109 = vmatpush.msra.mxu0 0.0
    %2110 = vmatpush.msra.mxu0 0.0
    %2111 = vmatpush.msra.mxu0 0.0
    %2112 = vmatpush.msra.mxu0 0.0
    %2113 = vmatpush.msra.mxu0 0.0
    %2114 = vmatpush.msra.mxu0 %v1247
    %2115 = vmatpush.msra.mxu0 %v1212
    %2116 = vmatpush.msra.mxu0 %v1177
    %2117 = vmatpush.msra.mxu0 %v1142
    %2118 = vmatmul.f32.gmra.mxu0 %v1337
    %v2119 = vpop.f32.mrf.mxu0
    %v2120 = vadd.f32 %v1292, %v2119
    %2121 = vmatmul.f32.gmra.mxu0 %v1340
    %v2122 = vpop.f32.mrf.mxu0
    %v2123 = vadd.f32 %v1292, %v2122
    %2124 = vmatmul.f32.gmra.mxu0 %v1343
    %v2125 = vpop.f32.mrf.mxu0
    %v2126 = vadd.f32 %v1292, %v2125
    %2127 = vmatmul.f32.gmra.mxu0 %v1346
    %v2128 = vpop.f32.mrf.mxu0
    %v2129 = vadd.f32 %v1292, %v2128
    %2130 = vdwg.mxu0
    %2131 = vmatpush.msra.mxu0 0.0
    %2132 = vmatpush.msra.mxu0 0.0
    %2133 = vmatpush.msra.mxu0 0.0
    %2134 = vmatpush.msra.mxu0 0.0
    %2135 = vmatpush.msra.mxu0 0.0
    %2136 = vmatpush.msra.mxu0 0.0
    %2137 = vmatpush.msra.mxu0 0.0
    %2138 = vmatpush.msra.mxu0 0.0
    %2139 = vmatpush.msra.mxu0 0.0
    %2140 = vmatpush.msra.mxu0 0.0
    %2141 = vmatpush.msra.mxu0 0.0
    %2142 = vmatpush.msra.mxu0 0.0
    %2143 = vmatpush.msra.mxu0 %v1248
    %2144 = vmatpush.msra.mxu0 %v1213
    %2145 = vmatpush.msra.mxu0 %v1178
    %2146 = vmatpush.msra.mxu0 %v1143
    %2147 = vmatmul.f32.gmra.mxu0 %v1337
    %v2148 = vpop.f32.mrf.mxu0
    %v2149 = vadd.f32 %v1293, %v2148
    %2150 = vmatmul.f32.gmra.mxu0 %v1340
    %v2151 = vpop.f32.mrf.mxu0
    %v2152 = vadd.f32 %v1293, %v2151
    %2153 = vmatmul.f32.gmra.mxu0 %v1343
    %v2154 = vpop.f32.mrf.mxu0
    %v2155 = vadd.f32 %v1293, %v2154
    %2156 = vmatmul.f32.gmra.mxu0 %v1346
    %v2157 = vpop.f32.mrf.mxu0
    %v2158 = vadd.f32 %v1293, %v2157
    %2159 = vdwg.mxu0
    %2160 = vmatpush.msra.mxu0 0.0
    %2161 = vmatpush.msra.mxu0 0.0
    %2162 = vmatpush.msra.mxu0 0.0
    %2163 = vmatpush.msra.mxu0 0.0
    %2164 = vmatpush.msra.mxu0 0.0
    %2165 = vmatpush.msra.mxu0 0.0
    %2166 = vmatpush.msra.mxu0 0.0
    %2167 = vmatpush.msra.mxu0 0.0
    %2168 = vmatpush.msra.mxu0 0.0
    %2169 = vmatpush.msra.mxu0 0.0
    %2170 = vmatpush.msra.mxu0 0.0
    %2171 = vmatpush.msra.mxu0 0.0
    %2172 = vmatpush.msra.mxu0 %v1249
    %2173 = vmatpush.msra.mxu0 %v1214
    %2174 = vmatpush.msra.mxu0 %v1179
    %2175 = vmatpush.msra.mxu0 %v1144
    %2176 = vmatmul.f32.gmra.mxu0 %v1337
    %v2177 = vpop.f32.mrf.mxu0
    %v2178 = vadd.f32 %v1294, %v2177
    %2179 = vmatmul.f32.gmra.mxu0 %v1340
    %v2180 = vpop.f32.mrf.mxu0
    %v2181 = vadd.f32 %v1294, %v2180
    %2182 = vmatmul.f32.gmra.mxu0 %v1343
    %v2183 = vpop.f32.mrf.mxu0
    %v2184 = vadd.f32 %v1294, %v2183
    %2185 = vmatmul.f32.gmra.mxu0 %v1346
    %v2186 = vpop.f32.mrf.mxu0
    %v2187 = vadd.f32 %v1294, %v2186
    %2188 = vdwg.mxu0
    %2189 = vmatpush.msra.mxu0 0.0
    %2190 = vmatpush.msra.mxu0 0.0
    %2191 = vmatpush.msra.mxu0 0.0
    %2192 = vmatpush.msra.mxu0 0.0
    %2193 = vmatpush.msra.mxu0 0.0
    %2194 = vmatpush.msra.mxu0 0.0
    %2195 = vmatpush.msra.mxu0 0.0
    %2196 = vmatpush.msra.mxu0 0.0
    %2197 = vmatpush.msra.mxu0 0.0
    %2198 = vmatpush.msra.mxu0 0.0
    %2199 = vmatpush.msra.mxu0 0.0
    %2200 = vmatpush.msra.mxu0 0.0
    %2201 = vmatpush.msra.mxu0 %v1250
    %2202 = vmatpush.msra.mxu0 %v1215
    %2203 = vmatpush.msra.mxu0 %v1180
    %2204 = vmatpush.msra.mxu0 %v1145
    %2205 = vmatmul.f32.gmra.mxu0 %v1337
    %v2206 = vpop.f32.mrf.mxu0
    %v2207 = vadd.f32 %v1295, %v2206
    %2208 = vmatmul.f32.gmra.mxu0 %v1340
    %v2209 = vpop.f32.mrf.mxu0
    %v2210 = vadd.f32 %v1295, %v2209
    %2211 = vmatmul.f32.gmra.mxu0 %v1343
    %v2212 = vpop.f32.mrf.mxu0
    %v2213 = vadd.f32 %v1295, %v2212
    %2214 = vmatmul.f32.gmra.mxu0 %v1346
    %v2215 = vpop.f32.mrf.mxu0
    %v2216 = vadd.f32 %v1295, %v2215
    %2217 = vdwg.mxu0
    %2218 = vmatpush.msra.mxu0 0.0
    %2219 = vmatpush.msra.mxu0 0.0
    %2220 = vmatpush.msra.mxu0 0.0
    %2221 = vmatpush.msra.mxu0 0.0
    %2222 = vmatpush.msra.mxu0 0.0
    %2223 = vmatpush.msra.mxu0 0.0
    %2224 = vmatpush.msra.mxu0 0.0
    %2225 = vmatpush.msra.mxu0 0.0
    %2226 = vmatpush.msra.mxu0 0.0
    %2227 = vmatpush.msra.mxu0 0.0
    %2228 = vmatpush.msra.mxu0 0.0
    %2229 = vmatpush.msra.mxu0 0.0
    %2230 = vmatpush.msra.mxu0 %v1251
    %2231 = vmatpush.msra.mxu0 %v1216
    %2232 = vmatpush.msra.mxu0 %v1181
    %2233 = vmatpush.msra.mxu0 %v1146
    %2234 = vmatmul.f32.gmra.mxu0 %v1337
    %v2235 = vpop.f32.mrf.mxu0
    %v2236 = vadd.f32 %v1296, %v2235
    %2237 = vmatmul.f32.gmra.mxu0 %v1340
    %v2238 = vpop.f32.mrf.mxu0
    %v2239 = vadd.f32 %v1296, %v2238
    %2240 = vmatmul.f32.gmra.mxu0 %v1343
    %v2241 = vpop.f32.mrf.mxu0
    %v2242 = vadd.f32 %v1296, %v2241
    %2243 = vmatmul.f32.gmra.mxu0 %v1346
    %v2244 = vpop.f32.mrf.mxu0
    %v2245 = vadd.f32 %v1296, %v2244
    %2246 = vdwg.mxu0
    %2247 = vmatpush.msra.mxu0 0.0
    %2248 = vmatpush.msra.mxu0 0.0
    %2249 = vmatpush.msra.mxu0 0.0
    %2250 = vmatpush.msra.mxu0 0.0
    %2251 = vmatpush.msra.mxu0 0.0
    %2252 = vmatpush.msra.mxu0 0.0
    %2253 = vmatpush.msra.mxu0 0.0
    %2254 = vmatpush.msra.mxu0 0.0
    %2255 = vmatpush.msra.mxu0 0.0
    %2256 = vmatpush.msra.mxu0 0.0
    %2257 = vmatpush.msra.mxu0 0.0
    %2258 = vmatpush.msra.mxu0 0.0
    %2259 = vmatpush.msra.mxu0 %v1252
    %2260 = vmatpush.msra.mxu0 %v1217
    %2261 = vmatpush.msra.mxu0 %v1182
    %2262 = vmatpush.msra.mxu0 %v1147
    %2263 = vmatmul.f32.gmra.mxu0 %v1337
    %v2264 = vpop.f32.mrf.mxu0
    %v2265 = vadd.f32 %v1297, %v2264
    %2266 = vmatmul.f32.gmra.mxu0 %v1340
    %v2267 = vpop.f32.mrf.mxu0
    %v2268 = vadd.f32 %v1297, %v2267
    %2269 = vmatmul.f32.gmra.mxu0 %v1343
    %v2270 = vpop.f32.mrf.mxu0
    %v2271 = vadd.f32 %v1297, %v2270
    %2272 = vmatmul.f32.gmra.mxu0 %v1346
    %v2273 = vpop.f32.mrf.mxu0
    %v2274 = vadd.f32 %v1297, %v2273
    %2275 = vdwg.mxu0
    %2276 = vmatpush.msra.mxu0 0.0
    %2277 = vmatpush.msra.mxu0 0.0
    %2278 = vmatpush.msra.mxu0 0.0
    %2279 = vmatpush.msra.mxu0 0.0
    %2280 = vmatpush.msra.mxu0 0.0
    %2281 = vmatpush.msra.mxu0 0.0
    %2282 = vmatpush.msra.mxu0 0.0
    %2283 = vmatpush.msra.mxu0 0.0
    %2284 = vmatpush.msra.mxu0 0.0
    %2285 = vmatpush.msra.mxu0 0.0
    %2286 = vmatpush.msra.mxu0 0.0
    %2287 = vmatpush.msra.mxu0 0.0
    %2288 = vmatpush.msra.mxu0 %v1253
    %2289 = vmatpush.msra.mxu0 %v1218
    %2290 = vmatpush.msra.mxu0 %v1183
    %2291 = vmatpush.msra.mxu0 %v1148
    %2292 = vmatmul.f32.gmra.mxu0 %v1337
    %v2293 = vpop.f32.mrf.mxu0
    %v2294 = vadd.f32 %v1298, %v2293
    %2295 = vmatmul.f32.gmra.mxu0 %v1340
    %v2296 = vpop.f32.mrf.mxu0
    %v2297 = vadd.f32 %v1298, %v2296
    %2298 = vmatmul.f32.gmra.mxu0 %v1343
    %v2299 = vpop.f32.mrf.mxu0
    %v2300 = vadd.f32 %v1298, %v2299
    %2301 = vmatmul.f32.gmra.mxu0 %v1346
    %v2302 = vpop.f32.mrf.mxu0
    %v2303 = vadd.f32 %v1298, %v2302
    %2304 = vdwg.mxu0
    %2305 = vmatpush.msra.mxu0 0.0
    %2306 = vmatpush.msra.mxu0 0.0
    %2307 = vmatpush.msra.mxu0 0.0
    %2308 = vmatpush.msra.mxu0 0.0
    %2309 = vmatpush.msra.mxu0 0.0
    %2310 = vmatpush.msra.mxu0 0.0
    %2311 = vmatpush.msra.mxu0 0.0
    %2312 = vmatpush.msra.mxu0 0.0
    %2313 = vmatpush.msra.mxu0 0.0
    %2314 = vmatpush.msra.mxu0 0.0
    %2315 = vmatpush.msra.mxu0 0.0
    %2316 = vmatpush.msra.mxu0 0.0
    %2317 = vmatpush.msra.mxu0 %v1254
    %2318 = vmatpush.msra.mxu0 %v1219
    %2319 = vmatpush.msra.mxu0 %v1184
    %2320 = vmatpush.msra.mxu0 %v1149
    %2321 = vmatmul.f32.gmra.mxu0 %v1337
    %v2322 = vpop.f32.mrf.mxu0
    %v2323 = vadd.f32 %v1299, %v2322
    %2324 = vmatmul.f32.gmra.mxu0 %v1340
    %v2325 = vpop.f32.mrf.mxu0
    %v2326 = vadd.f32 %v1299, %v2325
    %2327 = vmatmul.f32.gmra.mxu0 %v1343
    %v2328 = vpop.f32.mrf.mxu0
    %v2329 = vadd.f32 %v1299, %v2328
    %2330 = vmatmul.f32.gmra.mxu0 %v1346
    %v2331 = vpop.f32.mrf.mxu0
    %v2332 = vadd.f32 %v1299, %v2331
    %2333 = vdwg.mxu0
    %2334 = vmatpush.msra.mxu0 0.0
    %2335 = vmatpush.msra.mxu0 0.0
    %2336 = vmatpush.msra.mxu0 0.0
    %2337 = vmatpush.msra.mxu0 0.0
    %2338 = vmatpush.msra.mxu0 0.0
    %2339 = vmatpush.msra.mxu0 0.0
    %2340 = vmatpush.msra.mxu0 0.0
    %2341 = vmatpush.msra.mxu0 0.0
    %2342 = vmatpush.msra.mxu0 0.0
    %2343 = vmatpush.msra.mxu0 0.0
    %2344 = vmatpush.msra.mxu0 0.0
    %2345 = vmatpush.msra.mxu0 0.0
    %2346 = vmatpush.msra.mxu0 %v1255
    %2347 = vmatpush.msra.mxu0 %v1220
    %2348 = vmatpush.msra.mxu0 %v1185
    %2349 = vmatpush.msra.mxu0 %v1150
    %2350 = vmatmul.f32.gmra.mxu0 %v1337
    %v2351 = vpop.f32.mrf.mxu0
    %v2352 = vadd.f32 %v1300, %v2351
    %2353 = vmatmul.f32.gmra.mxu0 %v1340
    %v2354 = vpop.f32.mrf.mxu0
    %v2355 = vadd.f32 %v1300, %v2354
    %2356 = vmatmul.f32.gmra.mxu0 %v1343
    %v2357 = vpop.f32.mrf.mxu0
    %v2358 = vadd.f32 %v1300, %v2357
    %2359 = vmatmul.f32.gmra.mxu0 %v1346
    %v2360 = vpop.f32.mrf.mxu0
    %v2361 = vadd.f32 %v1300, %v2360
    %2362 = vdwg.mxu0
    %v2363 = vmax.f32 %v1366, 0.0
    %v2364 = vmax.f32 %v1395, 0.0
    %v2365 = vmax.f32 %v1424, 0.0
    %v2366 = vmax.f32 %v1453, 0.0
    %v2367 = vmax.f32 %v1482, 0.0
    %v2368 = vmax.f32 %v1511, 0.0
    %v2369 = vmax.f32 %v1540, 0.0
    %v2370 = vmax.f32 %v1569, 0.0
    %v2371 = vmax.f32 %v1598, 0.0
    %v2372 = vmax.f32 %v1627, 0.0
    %v2373 = vmax.f32 %v1656, 0.0
    %v2374 = vmax.f32 %v1685, 0.0
    %v2375 = vmax.f32 %v1714, 0.0
    %v2376 = vmax.f32 %v1743, 0.0
    %v2377 = vmax.f32 %v1772, 0.0
    %v2378 = vmax.f32 %v1801, 0.0
    %v2379 = vmax.f32 %v1830, 0.0
    %v2380 = vmax.f32 %v1859, 0.0
    %v2381 = vmax.f32 %v1888, 0.0
    %v2382 = vmax.f32 %v1917, 0.0
    %v2383 = vmax.f32 %v1946, 0.0
    %v2384 = vmax.f32 %v1975, 0.0
    %v2385 = vmax.f32 %v2004, 0.0
    %v2386 = vmax.f32 %v2033, 0.0
    %v2387 = vmax.f32 %v2062, 0.0
    %v2388 = vmax.f32 %v2091, 0.0
    %v2389 = vmax.f32 %v2120, 0.0
    %v2390 = vmax.f32 %v2149, 0.0
    %v2391 = vmax.f32 %v2178, 0.0
    %v2392 = vmax.f32 %v2207, 0.0
    %v2393 = vmax.f32 %v2236, 0.0
    %v2394 = vmax.f32 %v2265, 0.0
    %v2395 = vmax.f32 %v2294, 0.0
    %v2396 = vmax.f32 %v2323, 0.0
    %v2397 = vmax.f32 %v2352, 0.0
    %v2398 = vmax.f32 %v1369, 0.0
    %v2399 = vmax.f32 %v1398, 0.0
    %v2400 = vmax.f32 %v1427, 0.0
    %v2401 = vmax.f32 %v1456, 0.0
    %v2402 = vmax.f32 %v1485, 0.0
    %v2403 = vmax.f32 %v1514, 0.0
    %v2404 = vmax.f32 %v1543, 0.0
    %v2405 = vmax.f32 %v1572, 0.0
    %v2406 = vmax.f32 %v1601, 0.0
    %v2407 = vmax.f32 %v1630, 0.0
    %v2408 = vmax.f32 %v1659, 0.0
    %v2409 = vmax.f32 %v1688, 0.0
    %v2410 = vmax.f32 %v1717, 0.0
    %v2411 = vmax.f32 %v1746, 0.0
    %v2412 = vmax.f32 %v1775, 0.0
    %v2413 = vmax.f32 %v1804, 0.0
    %v2414 = vmax.f32 %v1833, 0.0
    %v2415 = vmax.f32 %v1862, 0.0
    %v2416 = vmax.f32 %v1891, 0.0
    %v2417 = vmax.f32 %v1920, 0.0
    %v2418 = vmax.f32 %v1949, 0.0
    %v2419 = vmax.f32 %v1978, 0.0
    %v2420 = vmax.f32 %v2007, 0.0
    %v2421 = vmax.f32 %v2036, 0.0
    %v2422 = vmax.f32 %v2065, 0.0
    %v2423 = vmax.f32 %v2094, 0.0
    %v2424 = vmax.f32 %v2123, 0.0
    %v2425 = vmax.f32 %v2152, 0.0
    %v2426 = vmax.f32 %v2181, 0.0
    %v2427 = vmax.f32 %v2210, 0.0
    %v2428 = vmax.f32 %v2239, 0.0
    %v2429 = vmax.f32 %v2268, 0.0
    %v2430 = vmax.f32 %v2297, 0.0
    %v2431 = vmax.f32 %v2326, 0.0
    %v2432 = vmax.f32 %v2355, 0.0
    %v2433 = vmax.f32 %v1372, 0.0
    %v2434 = vmax.f32 %v1401, 0.0
    %v2435 = vmax.f32 %v1430, 0.0
    %v2436 = vmax.f32 %v1459, 0.0
    %v2437 = vmax.f32 %v1488, 0.0
    %v2438 = vmax.f32 %v1517, 0.0
    %v2439 = vmax.f32 %v1546, 0.0
    %v2440 = vmax.f32 %v1575, 0.0
    %v2441 = vmax.f32 %v1604, 0.0
    %v2442 = vmax.f32 %v1633, 0.0
    %v2443 = vmax.f32 %v1662, 0.0
    %v2444 = vmax.f32 %v1691, 0.0
    %v2445 = vmax.f32 %v1720, 0.0
    %v2446 = vmax.f32 %v1749, 0.0
    %v2447 = vmax.f32 %v1778, 0.0
    %v2448 = vmax.f32 %v1807, 0.0
    %v2449 = vmax.f32 %v1836, 0.0
    %v2450 = vmax.f32 %v1865, 0.0
    %v2451 = vmax.f32 %v1894, 0.0
    %v2452 = vmax.f32 %v1923, 0.0
    %v2453 = vmax.f32 %v1952, 0.0
    %v2454 = vmax.f32 %v1981, 0.0
    %v2455 = vmax.f32 %v2010, 0.0
    %v2456 = vmax.f32 %v2039, 0.0
    %v2457 = vmax.f32 %v2068, 0.0
    %v2458 = vmax.f32 %v2097, 0.0
    %v2459 = vmax.f32 %v2126, 0.0
    %v2460 = vmax.f32 %v2155, 0.0
    %v2461 = vmax.f32 %v2184, 0.0
    %v2462 = vmax.f32 %v2213, 0.0
    %v2463 = vmax.f32 %v2242, 0.0
    %v2464 = vmax.f32 %v2271, 0.0
    %v2465 = vmax.f32 %v2300, 0.0
    %v2466 = vmax.f32 %v2329, 0.0
    %v2467 = vmax.f32 %v2358, 0.0
    %v2468 = vmax.f32 %v1375, 0.0
    %v2469 = vmax.f32 %v1404, 0.0
    %v2470 = vmax.f32 %v1433, 0.0
    %v2471 = vmax.f32 %v1462, 0.0
    %v2472 = vmax.f32 %v1491, 0.0
    %v2473 = vmax.f32 %v1520, 0.0
    %v2474 = vmax.f32 %v1549, 0.0
    %v2475 = vmax.f32 %v1578, 0.0
    %v2476 = vmax.f32 %v1607, 0.0
    %v2477 = vmax.f32 %v1636, 0.0
    %v2478 = vmax.f32 %v1665, 0.0
    %v2479 = vmax.f32 %v1694, 0.0
    %v2480 = vmax.f32 %v1723, 0.0
    %v2481 = vmax.f32 %v1752, 0.0
    %v2482 = vmax.f32 %v1781, 0.0
    %v2483 = vmax.f32 %v1810, 0.0
    %v2484 = vmax.f32 %v1839, 0.0
    %v2485 = vmax.f32 %v1868, 0.0
    %v2486 = vmax.f32 %v1897, 0.0
    %v2487 = vmax.f32 %v1926, 0.0
    %v2488 = vmax.f32 %v1955, 0.0
    %v2489 = vmax.f32 %v1984, 0.0
    %v2490 = vmax.f32 %v2013, 0.0
    %v2491 = vmax.f32 %v2042, 0.0
    %v2492 = vmax.f32 %v2071, 0.0
    %v2493 = vmax.f32 %v2100, 0.0
    %v2494 = vmax.f32 %v2129, 0.0
    %v2495 = vmax.f32 %v2158, 0.0
    %v2496 = vmax.f32 %v2187, 0.0
    %v2497 = vmax.f32 %v2216, 0.0
    %v2498 = vmax.f32 %v2245, 0.0
    %v2499 = vmax.f32 %v2274, 0.0
    %v2500 = vmax.f32 %v2303, 0.0
    %v2501 = vmax.f32 %v2332, 0.0
    %v2502 = vmax.f32 %v2361, 0.0
    %2503 = vst [vmem:[#allocation17] sm:$0xff] %v2363
    %2504 = vst [vmem:[#allocation17 + $0x8] sm:$0xff] %v2364
    %2505 = vst [vmem:[#allocation17 + $0x10] sm:$0xff] %v2365
    %2506 = vst [vmem:[#allocation17 + $0x18] sm:$0xff] %v2366
    %2507 = vst [vmem:[#allocation17 + $0x20] sm:$0xff] %v2367
    %2508 = vst [vmem:[#allocation17 + $0x28] sm:$0xff] %v2368
    %2509 = vst [vmem:[#allocation17 + $0x30] sm:$0xff] %v2369
    %2510 = vst [vmem:[#allocation17 + $0x38] sm:$0xff] %v2370
    %2511 = vst [vmem:[#allocation17 + $0x40] sm:$0xff] %v2371
    %2512 = vst [vmem:[#allocation17 + $0x48] sm:$0xff] %v2372
    %2513 = vst [vmem:[#allocation17 + $0x50] sm:$0xff] %v2373
    %2514 = vst [vmem:[#allocation17 + $0x58] sm:$0xff] %v2374
    %2515 = vst [vmem:[#allocation17 + $0x60] sm:$0xff] %v2375
    %2516 = vst [vmem:[#allocation17 + $0x68] sm:$0xff] %v2376
    %2517 = vst [vmem:[#allocation17 + $0x70] sm:$0xff] %v2377
    %2518 = vst [vmem:[#allocation17 + $0x78] sm:$0xff] %v2378
    %2519 = vst [vmem:[#allocation17 + $0x80] sm:$0xff] %v2379
    %2520 = vst [vmem:[#allocation17 + $0x88] sm:$0xff] %v2380
    %2521 = vst [vmem:[#allocation17 + $0x90] sm:$0xff] %v2381
    %2522 = vst [vmem:[#allocation17 + $0x98] sm:$0xff] %v2382
    %2523 = vst [vmem:[#allocation17 + $0xa0] sm:$0xff] %v2383
    %2524 = vst [vmem:[#allocation17 + $0xa8] sm:$0xff] %v2384
    %2525 = vst [vmem:[#allocation17 + $0xb0] sm:$0xff] %v2385
    %2526 = vst [vmem:[#allocation17 + $0xb8] sm:$0xff] %v2386
    %2527 = vst [vmem:[#allocation17 + $0xc0] sm:$0xff] %v2387
    %2528 = vst [vmem:[#allocation17 + $0xc8] sm:$0xff] %v2388
    %2529 = vst [vmem:[#allocation17 + $0xd0] sm:$0xff] %v2389
    %2530 = vst [vmem:[#allocation17 + $0xd8] sm:$0xff] %v2390
    %2531 = vst [vmem:[#allocation17 + $0xe0] sm:$0xff] %v2391
    %2532 = vst [vmem:[#allocation17 + $0xe8] sm:$0xff] %v2392
    %2533 = vst [vmem:[#allocation17 + $0xf0] sm:$0xff] %v2393
    %2534 = vst [vmem:[#allocation17 + $0xf8] sm:$0xff] %v2394
    %2535 = vst [vmem:[#allocation17 + $0x100] sm:$0xff] %v2395
    %2536 = vst [vmem:[#allocation17 + $0x108] sm:$0xff] %v2396
    %2537 = vst [vmem:[#allocation17 + $0x110] sm:$0xff] %v2397
    %2538 = vst [vmem:[#allocation17 + $0x118] sm:$0xff] %v2398
    %2539 = vst [vmem:[#allocation17 + $0x120] sm:$0xff] %v2399
    %2540 = vst [vmem:[#allocation17 + $0x128] sm:$0xff] %v2400
    %2541 = vst [vmem:[#allocation17 + $0x130] sm:$0xff] %v2401
    %2542 = vst [vmem:[#allocation17 + $0x138] sm:$0xff] %v2402
    %2543 = vst [vmem:[#allocation17 + $0x140] sm:$0xff] %v2403
    %2544 = vst [vmem:[#allocation17 + $0x148] sm:$0xff] %v2404
    %2545 = vst [vmem:[#allocation17 + $0x150] sm:$0xff] %v2405
    %2546 = vst [vmem:[#allocation17 + $0x158] sm:$0xff] %v2406
    %2547 = vst [vmem:[#allocation17 + $0x160] sm:$0xff] %v2407
    %2548 = vst [vmem:[#allocation17 + $0x168] sm:$0xff] %v2408
    %2549 = vst [vmem:[#allocation17 + $0x170] sm:$0xff] %v2409
    %2550 = vst [vmem:[#allocation17 + $0x178] sm:$0xff] %v2410
    %2551 = vst [vmem:[#allocation17 + $0x180] sm:$0xff] %v2411
    %2552 = vst [vmem:[#allocation17 + $0x188] sm:$0xff] %v2412
    %2553 = vst [vmem:[#allocation17 + $0x190] sm:$0xff] %v2413
    %2554 = vst [vmem:[#allocation17 + $0x198] sm:$0xff] %v2414
    %2555 = vst [vmem:[#allocation17 + $0x1a0] sm:$0xff] %v2415
    %2556 = vst [vmem:[#allocation17 + $0x1a8] sm:$0xff] %v2416
    %2557 = vst [vmem:[#allocation17 + $0x1b0] sm:$0xff] %v2417
    %2558 = vst [vmem:[#allocation17 + $0x1b8] sm:$0xff] %v2418
    %2559 = vst [vmem:[#allocation17 + $0x1c0] sm:$0xff] %v2419
    %2560 = vst [vmem:[#allocation17 + $0x1c8] sm:$0xff] %v2420
    %2561 = vst [vmem:[#allocation17 + $0x1d0] sm:$0xff] %v2421
    %2562 = vst [vmem:[#allocation17 + $0x1d8] sm:$0xff] %v2422
    %2563 = vst [vmem:[#allocation17 + $0x1e0] sm:$0xff] %v2423
    %2564 = vst [vmem:[#allocation17 + $0x1e8] sm:$0xff] %v2424
    %2565 = vst [vmem:[#allocation17 + $0x1f0] sm:$0xff] %v2425
    %2566 = vst [vmem:[#allocation17 + $0x1f8] sm:$0xff] %v2426
    %2567 = vst [vmem:[#allocation17 + $0x200] sm:$0xff] %v2427
    %2568 = vst [vmem:[#allocation17 + $0x208] sm:$0xff] %v2428
    %2569 = vst [vmem:[#allocation17 + $0x210] sm:$0xff] %v2429
    %2570 = vst [vmem:[#allocation17 + $0x218] sm:$0xff] %v2430
    %2571 = vst [vmem:[#allocation17 + $0x220] sm:$0xff] %v2431
    %2572 = vst [vmem:[#allocation17 + $0x228] sm:$0xff] %v2432
    %2573 = vst [vmem:[#allocation17 + $0x230] sm:$0xff] %v2433
    %2574 = vst [vmem:[#allocation17 + $0x238] sm:$0xff] %v2434
    %2575 = vst [vmem:[#allocation17 + $0x240] sm:$0xff] %v2435
    %2576 = vst [vmem:[#allocation17 + $0x248] sm:$0xff] %v2436
    %2577 = vst [vmem:[#allocation17 + $0x250] sm:$0xff] %v2437
    %2578 = vst [vmem:[#allocation17 + $0x258] sm:$0xff] %v2438
    %2579 = vst [vmem:[#allocation17 + $0x260] sm:$0xff] %v2439
    %2580 = vst [vmem:[#allocation17 + $0x268] sm:$0xff] %v2440
    %2581 = vst [vmem:[#allocation17 + $0x270] sm:$0xff] %v2441
    %2582 = vst [vmem:[#allocation17 + $0x278] sm:$0xff] %v2442
    %2583 = vst [vmem:[#allocation17 + $0x280] sm:$0xff] %v2443
    %2584 = vst [vmem:[#allocation17 + $0x288] sm:$0xff] %v2444
    %2585 = vst [vmem:[#allocation17 + $0x290] sm:$0xff] %v2445
    %2586 = vst [vmem:[#allocation17 + $0x298] sm:$0xff] %v2446
    %2587 = vst [vmem:[#allocation17 + $0x2a0] sm:$0xff] %v2447
    %2588 = vst [vmem:[#allocation17 + $0x2a8] sm:$0xff] %v2448
    %2589 = vst [vmem:[#allocation17 + $0x2b0] sm:$0xff] %v2449
    %2590 = vst [vmem:[#allocation17 + $0x2b8] sm:$0xff] %v2450
    %2591 = vst [vmem:[#allocation17 + $0x2c0] sm:$0xff] %v2451
    %2592 = vst [vmem:[#allocation17 + $0x2c8] sm:$0xff] %v2452
    %2593 = vst [vmem:[#allocation17 + $0x2d0] sm:$0xff] %v2453
    %2594 = vst [vmem:[#allocation17 + $0x2d8] sm:$0xff] %v2454
    %2595 = vst [vmem:[#allocation17 + $0x2e0] sm:$0xff] %v2455
    %2596 = vst [vmem:[#allocation17 + $0x2e8] sm:$0xff] %v2456
    %2597 = vst [vmem:[#allocation17 + $0x2f0] sm:$0xff] %v2457
    %2598 = vst [vmem:[#allocation17 + $0x2f8] sm:$0xff] %v2458
    %2599 = vst [vmem:[#allocation17 + $0x300] sm:$0xff] %v2459
    %2600 = vst [vmem:[#allocation17 + $0x308] sm:$0xff] %v2460
    %2601 = vst [vmem:[#allocation17 + $0x310] sm:$0xff] %v2461
    %2602 = vst [vmem:[#allocation17 + $0x318] sm:$0xff] %v2462
    %2603 = vst [vmem:[#allocation17 + $0x320] sm:$0xff] %v2463
    %2604 = vst [vmem:[#allocation17 + $0x328] sm:$0xff] %v2464
    %2605 = vst [vmem:[#allocation17 + $0x330] sm:$0xff] %v2465
    %2606 = vst [vmem:[#allocation17 + $0x338] sm:$0xff] %v2466
    %2607 = vst [vmem:[#allocation17 + $0x340] sm:$0xff] %v2467
    %2608 = vst [vmem:[#allocation17 + $0x348] sm:$0xff] %v2468
    %2609 = vst [vmem:[#allocation17 + $0x350] sm:$0xff] %v2469
    %2610 = vst [vmem:[#allocation17 + $0x358] sm:$0xff] %v2470
    %2611 = vst [vmem:[#allocation17 + $0x360] sm:$0xff] %v2471
    %2612 = vst [vmem:[#allocation17 + $0x368] sm:$0xff] %v2472
    %2613 = vst [vmem:[#allocation17 + $0x370] sm:$0xff] %v2473
    %2614 = vst [vmem:[#allocation17 + $0x378] sm:$0xff] %v2474
    %2615 = vst [vmem:[#allocation17 + $0x380] sm:$0xff] %v2475
    %2616 = vst [vmem:[#allocation17 + $0x388] sm:$0xff] %v2476
    %2617 = vst [vmem:[#allocation17 + $0x390] sm:$0xff] %v2477
    %2618 = vst [vmem:[#allocation17 + $0x398] sm:$0xff] %v2478
    %2619 = vst [vmem:[#allocation17 + $0x3a0] sm:$0xff] %v2479
    %2620 = vst [vmem:[#allocation17 + $0x3a8] sm:$0xff] %v2480
    %2621 = vst [vmem:[#allocation17 + $0x3b0] sm:$0xff] %v2481
    %2622 = vst [vmem:[#allocation17 + $0x3b8] sm:$0xff] %v2482
    %2623 = vst [vmem:[#allocation17 + $0x3c0] sm:$0xff] %v2483
    %2624 = vst [vmem:[#allocation17 + $0x3c8] sm:$0xff] %v2484
    %2625 = vst [vmem:[#allocation17 + $0x3d0] sm:$0xff] %v2485
    %2626 = vst [vmem:[#allocation17 + $0x3d8] sm:$0xff] %v2486
    %2627 = vst [vmem:[#allocation17 + $0x3e0] sm:$0xff] %v2487
    %2628 = vst [vmem:[#allocation17 + $0x3e8] sm:$0xff] %v2488
    %2629 = vst [vmem:[#allocation17 + $0x3f0] sm:$0xff] %v2489
    %2630 = vst [vmem:[#allocation17 + $0x3f8] sm:$0xff] %v2490
    %2631 = vst [vmem:[#allocation17 + $0x400] sm:$0xff] %v2491
    %2632 = vst [vmem:[#allocation17 + $0x408] sm:$0xff] %v2492
    %2633 = vst [vmem:[#allocation17 + $0x410] sm:$0xff] %v2493
    %2634 = vst [vmem:[#allocation17 + $0x418] sm:$0xff] %v2494
    %2635 = vst [vmem:[#allocation17 + $0x420] sm:$0xff] %v2495
    %2636 = vst [vmem:[#allocation17 + $0x428] sm:$0xff] %v2496
    %2637 = vst [vmem:[#allocation17 + $0x430] sm:$0xff] %v2497
    %2638 = vst [vmem:[#allocation17 + $0x438] sm:$0xff] %v2498
    %2639 = vst [vmem:[#allocation17 + $0x440] sm:$0xff] %v2499
    %2640 = vst [vmem:[#allocation17 + $0x448] sm:$0xff] %v2500
    %2641 = vst [vmem:[#allocation17 + $0x450] sm:$0xff] %v2501
    %2642 = vst [vmem:[#allocation17 + $0x458] sm:$0xff] %v2502
    // Predicated region
    $region70: #{tpu_custom_call.1} parent=1 // pred_check
      _
    $region71: #{tpu_custom_call.1} parent=1 // pred_check_branch
      %2644 = sbr.rel (0) target = $region73
    $region72: #{tpu_custom_call.1} parent=1 // pred_region
      %2646 = vsyncadd [#allocation4], 0
      %s2647 = sshll.u32 [#allocation16], 4
      %s2648 = int_to_ptr.vmem [resolvable:$true] %s2647
      %s2649 = sshll.u32 %s9, 4
      %s2650 = int_to_ptr.hbm [resolvable:$true] %s2649
      %2655 = dma.vmem_to_hbm [thread:$0]  %s2648, 512, %s2650, [#allocation4], 128, 128, 8
    $region73: #{tpu_custom_call.1} parent=1 // pred_fallthru
      _
    // Predicated region
    $region74: #{tpu_custom_call.1} parent=1 // pred_check
      _
    $region75: #{tpu_custom_call.1} parent=1 // pred_check_branch
      %2657 = sbr.rel (0) target = $region77
    $region76: #{tpu_custom_call.1} parent=1 // pred_region
      %2659 = vsyncadd [#allocation18], 0
      %s2660 = sshll.u32 [#allocation17], 4
      %s2661 = int_to_ptr.vmem [resolvable:$true] %s2660
      %s2662 = sshll.u32 %s10, 4
      %s2663 = int_to_ptr.hbm [resolvable:$true] %s2662
      %2668 = dma.vmem_to_hbm [thread:$0]  %s2661, 17920, %s2663, [#allocation18], 4480, 4480, 280
    $region77: #{tpu_custom_call.1} parent=1 // pred_fallthru
      _
    // Predicated region
    $region78: #{tpu_custom_call.1} parent=1 // pred_check
      _
    $region79: #{tpu_custom_call.1} parent=1 // pred_check_branch
      %2670 = sbr.rel (0) target = $region81
    $region80: #{tpu_custom_call.1} parent=1 // pred_region
      %2672 = dma.done [#allocation4], 512
    $region81: #{tpu_custom_call.1} parent=1 // pred_fallthru
      _
    // Predicated region
    $region82: #{tpu_custom_call.1} parent=1 // pred_check
      _
    $region83: #{tpu_custom_call.1} parent=1 // pred_check_branch
      %2674 = sbr.rel (0) target = $region85
    $region84: #{tpu_custom_call.1} parent=1 // pred_region
      %2676 = dma.done [#allocation18], 17920
    $region85: #{tpu_custom_call.1} parent=1 // pred_fallthru
      _
    %2677 = vsyncpa [#allocation3], 1
    %2678 = vsyncpa [#allocation6], 1
    %2679 = vsyncpa [#allocation9], 1
    %2680 = vsyncpa [#allocation12], 1
    %2681 = vsyncpa [#allocation15], 1
    %2682 = vsyncpa [#allocation4], 1
    %2683 = vsyncpa [#allocation18], 1

</llo_original>
